<compile_context>
chip_gen: v7x
topology: tpu7x:2x2x1
jax: 0.10.0
libtpu: 0.0.40
codegen_flags: <defaults>
</compile_context>

<pallas_src>
import functools

import jax
import jax.numpy as jnp
from jax import lax
from jax.experimental import pallas as pl
from jax.experimental.pallas import tpu as pltpu


# ------------------------------ fused kernel ------------------------------
def _derain_kernel(img_ref, b2_ref, invn_ref, mask_ref, w_ref, t_ref,
                   out_ref, act_ref, sc_ref, col_ref,
                   *, n_ch, n_feat, n_mid, eps, shifts):
    # Per-image data: channels on sublanes, flattened H*W on the 128-lane axis.
    x = img_ref[0]                       # (n_feat, HW); rows >= n_ch are zero
    b2 = b2_ref[...]                     # (HW, HW) 0/1 box-window matrix
    inv_n = invn_ref[...]                # (1, HW)  1 / window pixel count
    mask_v = [mask_ref[t] for t in range(9)]   # 9 x (1, HW) boundary masks

    # ---------------- guided filter (self-guided box filter) ----------------
    def wmean(z):                        # windowed mean: box(z) / N
        return jnp.dot(z, b2, preferred_element_type=jnp.float32) * inv_n

    mean_x = wmean(x)
    var_x = wmean(x * x) - mean_x * mean_x
    a = var_x / (var_x + eps)
    b = mean_x - a * mean_x
    base = wmean(a) * x + wmean(b)
    act_ref[...] = x - base              # detail (zero-padded rows stay zero)

    # ------------- one 3x3 conv + folded BN (+ReLU), all in VMEM -------------
    def conv_layer(idx, relu):
        xin = act_ref[...]                               # (n_feat, HW)
        for t in range(9):                               # build im2col (9C, HW)
            sh = shifts[t]
            shifted = xin if sh == 0 else pltpu.roll(xin, shift=sh, axis=1)
            col_ref[t * n_feat:(t + 1) * n_feat, :] = shifted * mask_v[t]
        y = jnp.dot(w_ref[idx], col_ref[...],            # (C, 9C) @ (9C, HW)
                    preferred_element_type=jnp.float32)
        y = y + t_ref[idx]                               # folded bias + BN shift
        if relu:
            y = jnp.maximum(y, 0.0)
        return y

    act_ref[...] = conv_layer(0, True)                   # b1
    sc_ref[...] = act_ref[...]                           # shortcut

    def body(l, carry):                                  # b2: 24 conv layers
        act_ref[...] = conv_layer(l, True)
        return carry
    lax.fori_loop(1, 1 + n_mid, body, 0)

    act_ref[...] = act_ref[...] + sc_ref[...]            # output_shortcut
    y = conv_layer(1 + n_mid, False)                     # b3 (conv + BN, no ReLU)
    out_ref[0] = x[0:n_ch, :] + y[0:n_ch, :]             # images + neg_residual


# --------------------------- host-side constants ---------------------------
def make_geometry(H, W, radius):
    """Box-window matrix, 1/N, per-tap shifts (python ints) and border masks."""
    HW = H * W
    ih = jnp.arange(H)
    iw = jnp.arange(W)
    bh = (jnp.abs(ih[:, None] - ih[None, :]) <= radius).astype(jnp.float32)
    bw = (jnp.abs(iw[:, None] - iw[None, :]) <= radius).astype(jnp.float32)
    b2 = jnp.kron(bh, bw)                                   # (HW, HW)
    inv_n = (1.0 / jnp.sum(b2, axis=0)).reshape(1, HW)

    p = jnp.arange(HW)
    hh = p // W
    ww = p % W
    masks, shifts = [], []
    for ky in range(3):
        for kx in range(3):
            dy, dx = ky - 1, kx - 1
            shifts.append((-(dy * W + dx)) % HW)            # static python int
            m = ((hh + dy >= 0) & (hh + dy < H) &
                 (ww + dx >= 0) & (ww + dx < W))
            masks.append(m.astype(jnp.float32))
    masks = jnp.stack(masks, axis=0).reshape(9, 1, HW)
    return b2, inv_n, masks, tuple(shifts)


def make_conv_folded(key, cin, cout, cpad, bn_eps=0.001):
    """Conv2d(xavier_uniform, bias=0) + BatchNorm2d(eval) folded to (W, t)."""
    fan_in, fan_out = cin * 9, cout * 9
    bound = (6.0 / (fan_in + fan_out)) ** 0.5
    w = jax.random.uniform(key, (cout, cin, 3, 3), jnp.float32, -bound, bound)
    bias = jnp.zeros((cout,), jnp.float32)
    gamma = jnp.ones((cout,), jnp.float32)
    beta = jnp.zeros((cout,), jnp.float32)
    r_mean = jnp.zeros((cout,), jnp.float32)
    r_var = jnp.ones((cout,), jnp.float32)
    s = gamma / jnp.sqrt(r_var + bn_eps)
    t = beta + (bias - r_mean) * s
    # Fold BN scale into the weight; layout (cpad, 9*cpad) with rows matching
    # the in-kernel im2col order (tap-major, input-channel-minor). Pad to cpad.
    w_s = w * s[:, None, None, None]
    w_t = jnp.transpose(w_s, (0, 2, 3, 1))                  # (cout, ky, kx, cin)
    w_t = jnp.pad(w_t, ((0, cpad - cout), (0, 0), (0, 0), (0, cpad - cin)))
    w2 = w_t.reshape(cpad, 9 * cpad)
    t2 = jnp.pad(t, (0, cpad - cout)).reshape(cpad, 1)
    return w2, t2


# ------------------------------ forward pass ------------------------------
def derain_forward(images_nchw, geom, w_all, t_all, *, eps=1.0):
    b2, inv_n, masks, shifts = geom
    N, C, H, W = images_nchw.shape
    HW = H * W
    n_layers, n_feat, _ = w_all.shape
    n_mid = n_layers - 2
    # Pad channels once (3 -> n_features) so every layer works on (16, HW).
    img = jnp.pad(images_nchw.reshape(N, C, HW),
                  ((0, 0), (0, n_feat - C), (0, 0)))

    kern = functools.partial(_derain_kernel, n_ch=C, n_feat=n_feat,
                             n_mid=n_mid, eps=float(eps), shifts=shifts)
    out = pl.pallas_call(
        kern,
        out_shape=jax.ShapeDtypeStruct((N, C, HW), jnp.float32),
        grid=(N,),
        in_specs=[
            pl.BlockSpec((1, n_feat, HW), lambda n: (n, 0, 0)),        # image
            pl.BlockSpec((HW, HW), lambda n: (0, 0)),                  # box mat
            pl.BlockSpec((1, HW), lambda n: (0, 0)),                   # 1/N
            pl.BlockSpec((9, 1, HW), lambda n: (0, 0, 0)),             # masks
            pl.BlockSpec((n_layers, n_feat, 9 * n_feat),
                         lambda n: (0, 0, 0)),                         # weights
            pl.BlockSpec((n_layers, n_feat, 1), lambda n: (0, 0, 0)),  # shifts
        ],
        out_specs=pl.BlockSpec((1, C, HW), lambda n: (n, 0, 0)),
        scratch_shapes=[
            pltpu.VMEM((n_feat, HW), jnp.float32),        # activation
            pltpu.VMEM((n_feat, HW), jnp.float32),        # b1 shortcut
            pltpu.VMEM((9 * n_feat, HW), jnp.float32),    # im2col
        ],
        compiler_params=pltpu.CompilerParams(
            dimension_semantics=("parallel",)),
    )(img, b2, inv_n, masks, w_all, t_all)
    return out.reshape(N, C, H, W)


if __name__ == "__main__":
    n_channels, n_features = 3, 16
    B, H, W = 2, 16, 16

    key = jax.random.PRNGKey(0)
    k_img, k_par = jax.random.split(key)
    images = jax.random.uniform(k_img, (B, n_channels, H, W), jnp.float32)

    keys = jax.random.split(k_par, 26)
    folded = [make_conv_folded(keys[0], n_channels, n_features, n_features)]
    for i in range(1, 25):
        folded.append(make_conv_folded(keys[i], n_features, n_features,
                                       n_features))
    folded.append(make_conv_folded(keys[25], n_features, n_channels,
                                   n_features))
    w_all = jnp.stack([f[0] for f in folded])        # (26, 16, 144)
    t_all = jnp.stack([f[1] for f in folded])        # (26, 16, 1)

    geom = make_geometry(H, W, radius=15)

    fwd = jax.jit(lambda x: derain_forward(x, geom, w_all, t_all, eps=1.0))
    out = fwd(images)
    jax.block_until_ready(out)
    assert out.shape == images.shape and out.dtype == jnp.float32
    print("KERNEL_OK")
</pallas_src>

<mosaic_0001>
module attributes {stable_mosaic.version = 11 : i64} {
  func.func @_derain_kernel(%arg0: i32, %arg1: memref<1x16x256xf32, #tpu.memory_space<vmem>>, %arg2: memref<256x256xf32, #tpu.memory_space<vmem>>, %arg3: memref<1x256xf32, #tpu.memory_space<vmem>>, %arg4: memref<9x1x256xf32, #tpu.memory_space<vmem>>, %arg5: memref<26x16x144xf32, #tpu.memory_space<vmem>>, %arg6: memref<26x16x1xf32, #tpu.memory_space<vmem>>, %arg7: memref<1x3x256xf32, #tpu.memory_space<vmem>>, %arg8: memref<16x256xf32, #tpu.memory_space<vmem>>, %arg9: memref<16x256xf32, #tpu.memory_space<vmem>>, %arg10: memref<144x256xf32, #tpu.memory_space<vmem>>) attributes {dimension_semantics = [#tpu.dimension_semantics<parallel>], iteration_bounds = array<i64: 2>, scalar_prefetch = 0 : i64, scratch_operands = 3 : i64, tpu.core_type = #tpu.core_type<tc>, window_params = [{transform_indices = @transform_0, window_bounds = array<i64: 1, 16, 256>}, {pipeline_mode = #tpu.pipeline_mode<synchronous>, transform_indices = @transform_1, window_bounds = array<i64: 256, 256>}, {pipeline_mode = #tpu.pipeline_mode<synchronous>, transform_indices = @transform_2, window_bounds = array<i64: 1, 256>}, {pipeline_mode = #tpu.pipeline_mode<synchronous>, transform_indices = @transform_3, window_bounds = array<i64: 9, 1, 256>}, {pipeline_mode = #tpu.pipeline_mode<synchronous>, transform_indices = @transform_4, window_bounds = array<i64: 26, 16, 144>}, {pipeline_mode = #tpu.pipeline_mode<synchronous>, transform_indices = @transform_5, window_bounds = array<i64: 26, 16, 1>}, {transform_indices = @transform_6, window_bounds = array<i64: 1, 3, 256>}]} {
    %c0 = arith.constant 0 : index
    %c0_0 = arith.constant 0 : index
    %c0_1 = arith.constant 0 : index
    %0 = vector.load %arg1[%c0, %c0_0, %c0_1] : memref<1x16x256xf32, #tpu.memory_space<vmem>>, vector<1x16x256xf32>
    %1 = vector.shape_cast %0 : vector<1x16x256xf32> to vector<16x256xf32>
    %c0_2 = arith.constant 0 : index
    %c0_3 = arith.constant 0 : index
    %2 = vector.load %arg2[%c0_2, %c0_3] : memref<256x256xf32, #tpu.memory_space<vmem>>, vector<256x256xf32>
    %c0_4 = arith.constant 0 : index
    %c0_5 = arith.constant 0 : index
    %3 = vector.load %arg3[%c0_4, %c0_5] : memref<1x256xf32, #tpu.memory_space<vmem>>, vector<1x256xf32>
    %c0_6 = arith.constant 0 : index
    %c0_7 = arith.constant 0 : index
    %c0_8 = arith.constant 0 : index
    %4 = vector.load %arg4[%c0_6, %c0_7, %c0_8] : memref<9x1x256xf32, #tpu.memory_space<vmem>>, vector<1x1x256xf32>
    %5 = vector.shape_cast %4 : vector<1x1x256xf32> to vector<1x256xf32>
    %c1 = arith.constant 1 : index
    %c0_9 = arith.constant 0 : index
    %c0_10 = arith.constant 0 : index
    %6 = vector.load %arg4[%c1, %c0_9, %c0_10] : memref<9x1x256xf32, #tpu.memory_space<vmem>>, vector<1x1x256xf32>
    %7 = vector.shape_cast %6 : vector<1x1x256xf32> to vector<1x256xf32>
    %c2 = arith.constant 2 : index
    %c0_11 = arith.constant 0 : index
    %c0_12 = arith.constant 0 : index
    %8 = vector.load %arg4[%c2, %c0_11, %c0_12] : memref<9x1x256xf32, #tpu.memory_space<vmem>>, vector<1x1x256xf32>
    %9 = vector.shape_cast %8 : vector<1x1x256xf32> to vector<1x256xf32>
    %c3 = arith.constant 3 : index
    %c0_13 = arith.constant 0 : index
    %c0_14 = arith.constant 0 : index
    %10 = vector.load %arg4[%c3, %c0_13, %c0_14] : memref<9x1x256xf32, #tpu.memory_space<vmem>>, vector<1x1x256xf32>
    %11 = vector.shape_cast %10 : vector<1x1x256xf32> to vector<1x256xf32>
    %c4 = arith.constant 4 : index
    %c0_15 = arith.constant 0 : index
    %c0_16 = arith.constant 0 : index
    %12 = vector.load %arg4[%c4, %c0_15, %c0_16] : memref<9x1x256xf32, #tpu.memory_space<vmem>>, vector<1x1x256xf32>
    %13 = vector.shape_cast %12 : vector<1x1x256xf32> to vector<1x256xf32>
    %c5 = arith.constant 5 : index
    %c0_17 = arith.constant 0 : index
    %c0_18 = arith.constant 0 : index
    %14 = vector.load %arg4[%c5, %c0_17, %c0_18] : memref<9x1x256xf32, #tpu.memory_space<vmem>>, vector<1x1x256xf32>
    %15 = vector.shape_cast %14 : vector<1x1x256xf32> to vector<1x256xf32>
    %c6 = arith.constant 6 : index
    %c0_19 = arith.constant 0 : index
    %c0_20 = arith.constant 0 : index
    %16 = vector.load %arg4[%c6, %c0_19, %c0_20] : memref<9x1x256xf32, #tpu.memory_space<vmem>>, vector<1x1x256xf32>
    %17 = vector.shape_cast %16 : vector<1x1x256xf32> to vector<1x256xf32>
    %c7 = arith.constant 7 : index
    %c0_21 = arith.constant 0 : index
    %c0_22 = arith.constant 0 : index
    %18 = vector.load %arg4[%c7, %c0_21, %c0_22] : memref<9x1x256xf32, #tpu.memory_space<vmem>>, vector<1x1x256xf32>
    %19 = vector.shape_cast %18 : vector<1x1x256xf32> to vector<1x256xf32>
    %c8 = arith.constant 8 : index
    %c0_23 = arith.constant 0 : index
    %c0_24 = arith.constant 0 : index
    %20 = vector.load %arg4[%c8, %c0_23, %c0_24] : memref<9x1x256xf32, #tpu.memory_space<vmem>>, vector<1x1x256xf32>
    %21 = vector.shape_cast %20 : vector<1x1x256xf32> to vector<1x256xf32>
    %cst = arith.constant dense<0.000000e+00> : vector<16x256xf32>
    %22 = tpu.matmul %1, %2, %cst {dimension_numbers = #tpu.dot_dimension_numbers<[1], [0], [0], [1], [0, 0, 1, 1], [], []>} : vector<16x256xf32>, vector<256x256xf32>, vector<16x256xf32> -> vector<16x256xf32>
    %23 = vector.broadcast %3 : vector<1x256xf32> to vector<16x256xf32>
    %24 = arith.mulf %22, %23 : vector<16x256xf32>
    %25 = arith.mulf %1, %1 : vector<16x256xf32>
    %cst_25 = arith.constant dense<0.000000e+00> : vector<16x256xf32>
    %26 = tpu.matmul %25, %2, %cst_25 {dimension_numbers = #tpu.dot_dimension_numbers<[1], [0], [0], [1], [0, 0, 1, 1], [], []>} : vector<16x256xf32>, vector<256x256xf32>, vector<16x256xf32> -> vector<16x256xf32>
    %27 = vector.broadcast %3 : vector<1x256xf32> to vector<16x256xf32>
    %28 = arith.mulf %26, %27 : vector<16x256xf32>
    %29 = arith.mulf %24, %24 : vector<16x256xf32>
    %30 = arith.subf %28, %29 : vector<16x256xf32>
    %cst_26 = arith.constant 1.000000e+00 : f32
    %31 = vector.broadcast %cst_26 : f32 to vector<16x256xf32>
    %32 = arith.addf %30, %31 : vector<16x256xf32>
    %33 = arith.divf %30, %32 : vector<16x256xf32>
    %34 = arith.mulf %33, %24 : vector<16x256xf32>
    %35 = arith.subf %24, %34 : vector<16x256xf32>
    %cst_27 = arith.constant dense<0.000000e+00> : vector<16x256xf32>
    %36 = tpu.matmul %33, %2, %cst_27 {dimension_numbers = #tpu.dot_dimension_numbers<[1], [0], [0], [1], [0, 0, 1, 1], [], []>} : vector<16x256xf32>, vector<256x256xf32>, vector<16x256xf32> -> vector<16x256xf32>
    %37 = vector.broadcast %3 : vector<1x256xf32> to vector<16x256xf32>
    %38 = arith.mulf %36, %37 : vector<16x256xf32>
    %39 = arith.mulf %38, %1 : vector<16x256xf32>
    %cst_28 = arith.constant dense<0.000000e+00> : vector<16x256xf32>
    %40 = tpu.matmul %35, %2, %cst_28 {dimension_numbers = #tpu.dot_dimension_numbers<[1], [0], [0], [1], [0, 0, 1, 1], [], []>} : vector<16x256xf32>, vector<256x256xf32>, vector<16x256xf32> -> vector<16x256xf32>
    %41 = vector.broadcast %3 : vector<1x256xf32> to vector<16x256xf32>
    %42 = arith.mulf %40, %41 : vector<16x256xf32>
    %43 = arith.addf %39, %42 : vector<16x256xf32>
    %44 = arith.subf %1, %43 : vector<16x256xf32>
    %c0_29 = arith.constant 0 : index
    %c0_30 = arith.constant 0 : index
    %45 = vector.load %arg8[%c0_29, %c0_30] : memref<16x256xf32, #tpu.memory_space<vmem>>, vector<16x256xf32>
    tpu.vector_store %arg8[%c0_29, %c0_30], %44 {strides = array<i32>} : memref<16x256xf32, #tpu.memory_space<vmem>>, vector<16x256xf32>,
    %c0_31 = arith.constant 0 : index
    %c0_32 = arith.constant 0 : index
    %46 = vector.load %arg8[%c0_31, %c0_32] : memref<16x256xf32, #tpu.memory_space<vmem>>, vector<16x256xf32>
    %c17_i32 = arith.constant 17 : i32
    %47 = tpu.dynamic_rotate %46 by %c17_i32 dim 1 : vector<16x256xf32>, i32 -> vector<16x256xf32>
    %48 = vector.broadcast %5 : vector<1x256xf32> to vector<16x256xf32>
    %49 = arith.mulf %47, %48 : vector<16x256xf32>
    %c0_33 = arith.constant 0 : index
    %c0_34 = arith.constant 0 : index
    %50 = vector.load %arg10[%c0_33, %c0_34] : memref<144x256xf32, #tpu.memory_space<vmem>>, vector<16x256xf32>
    tpu.vector_store %arg10[%c0_33, %c0_34], %49 {strides = array<i32>} : memref<144x256xf32, #tpu.memory_space<vmem>>, vector<16x256xf32>,
    %c16_i32 = arith.constant 16 : i32
    %51 = tpu.dynamic_rotate %46 by %c16_i32 dim 1 : vector<16x256xf32>, i32 -> vector<16x256xf32>
    %52 = vector.broadcast %7 : vector<1x256xf32> to vector<16x256xf32>
    %53 = arith.mulf %51, %52 : vector<16x256xf32>
    %c16 = arith.constant 16 : index
    %c0_35 = arith.constant 0 : index
    %54 = vector.load %arg10[%c16, %c0_35] : memref<144x256xf32, #tpu.memory_space<vmem>>, vector<16x256xf32>
    tpu.vector_store %arg10[%c16, %c0_35], %53 {strides = array<i32>} : memref<144x256xf32, #tpu.memory_space<vmem>>, vector<16x256xf32>,
    %c15_i32 = arith.constant 15 : i32
    %55 = tpu.dynamic_rotate %46 by %c15_i32 dim 1 : vector<16x256xf32>, i32 -> vector<16x256xf32>
    %56 = vector.broadcast %9 : vector<1x256xf32> to vector<16x256xf32>
    %57 = arith.mulf %55, %56 : vector<16x256xf32>
    %c32 = arith.constant 32 : index
    %c0_36 = arith.constant 0 : index
    %58 = vector.load %arg10[%c32, %c0_36] : memref<144x256xf32, #tpu.memory_space<vmem>>, vector<16x256xf32>
    tpu.vector_store %arg10[%c32, %c0_36], %57 {strides = array<i32>} : memref<144x256xf32, #tpu.memory_space<vmem>>, vector<16x256xf32>,
    %c1_i32 = arith.constant 1 : i32
    %59 = tpu.dynamic_rotate %46 by %c1_i32 dim 1 : vector<16x256xf32>, i32 -> vector<16x256xf32>
    %60 = vector.broadcast %11 : vector<1x256xf32> to vector<16x256xf32>
    %61 = arith.mulf %59, %60 : vector<16x256xf32>
    %c48 = arith.constant 48 : index
    %c0_37 = arith.constant 0 : index
    %62 = vector.load %arg10[%c48, %c0_37] : memref<144x256xf32, #tpu.memory_space<vmem>>, vector<16x256xf32>
    tpu.vector_store %arg10[%c48, %c0_37], %61 {strides = array<i32>} : memref<144x256xf32, #tpu.memory_space<vmem>>, vector<16x256xf32>,
    %63 = vector.broadcast %13 : vector<1x256xf32> to vector<16x256xf32>
    %64 = arith.mulf %46, %63 : vector<16x256xf32>
    %c64 = arith.constant 64 : index
    %c0_38 = arith.constant 0 : index
    %65 = vector.load %arg10[%c64, %c0_38] : memref<144x256xf32, #tpu.memory_space<vmem>>, vector<16x256xf32>
    tpu.vector_store %arg10[%c64, %c0_38], %64 {strides = array<i32>} : memref<144x256xf32, #tpu.memory_space<vmem>>, vector<16x256xf32>,
    %c255_i32 = arith.constant 255 : i32
    %66 = tpu.dynamic_rotate %46 by %c255_i32 dim 1 : vector<16x256xf32>, i32 -> vector<16x256xf32>
    %67 = vector.broadcast %15 : vector<1x256xf32> to vector<16x256xf32>
    %68 = arith.mulf %66, %67 : vector<16x256xf32>
    %c80 = arith.constant 80 : index
    %c0_39 = arith.constant 0 : index
    %69 = vector.load %arg10[%c80, %c0_39] : memref<144x256xf32, #tpu.memory_space<vmem>>, vector<16x256xf32>
    tpu.vector_store %arg10[%c80, %c0_39], %68 {strides = array<i32>} : memref<144x256xf32, #tpu.memory_space<vmem>>, vector<16x256xf32>,
    %c241_i32 = arith.constant 241 : i32
    %70 = tpu.dynamic_rotate %46 by %c241_i32 dim 1 : vector<16x256xf32>, i32 -> vector<16x256xf32>
    %71 = vector.broadcast %17 : vector<1x256xf32> to vector<16x256xf32>
    %72 = arith.mulf %70, %71 : vector<16x256xf32>
    %c96 = arith.constant 96 : index
    %c0_40 = arith.constant 0 : index
    %73 = vector.load %arg10[%c96, %c0_40] : memref<144x256xf32, #tpu.memory_space<vmem>>, vector<16x256xf32>
    tpu.vector_store %arg10[%c96, %c0_40], %72 {strides = array<i32>} : memref<144x256xf32, #tpu.memory_space<vmem>>, vector<16x256xf32>,
    %c240_i32 = arith.constant 240 : i32
    %74 = tpu.dynamic_rotate %46 by %c240_i32 dim 1 : vector<16x256xf32>, i32 -> vector<16x256xf32>
    %75 = vector.broadcast %19 : vector<1x256xf32> to vector<16x256xf32>
    %76 = arith.mulf %74, %75 : vector<16x256xf32>
    %c112 = arith.constant 112 : index
    %c0_41 = arith.constant 0 : index
    %77 = vector.load %arg10[%c112, %c0_41] : memref<144x256xf32, #tpu.memory_space<vmem>>, vector<16x256xf32>
    tpu.vector_store %arg10[%c112, %c0_41], %76 {strides = array<i32>} : memref<144x256xf32, #tpu.memory_space<vmem>>, vector<16x256xf32>,
    %c239_i32 = arith.constant 239 : i32
    %78 = tpu.dynamic_rotate %46 by %c239_i32 dim 1 : vector<16x256xf32>, i32 -> vector<16x256xf32>
    %79 = vector.broadcast %21 : vector<1x256xf32> to vector<16x256xf32>
    %80 = arith.mulf %78, %79 : vector<16x256xf32>
    %c128 = arith.constant 128 : index
    %c0_42 = arith.constant 0 : index
    %81 = vector.load %arg10[%c128, %c0_42] : memref<144x256xf32, #tpu.memory_space<vmem>>, vector<16x256xf32>
    tpu.vector_store %arg10[%c128, %c0_42], %80 {strides = array<i32>} : memref<144x256xf32, #tpu.memory_space<vmem>>, vector<16x256xf32>,
    %c0_43 = arith.constant 0 : index
    %c0_44 = arith.constant 0 : index
    %c0_45 = arith.constant 0 : index
    %82 = vector.load %arg5[%c0_43, %c0_44, %c0_45] : memref<26x16x144xf32, #tpu.memory_space<vmem>>, vector<1x16x144xf32>
    %83 = vector.shape_cast %82 : vector<1x16x144xf32> to vector<16x144xf32>
    %c0_46 = arith.constant 0 : index
    %c0_47 = arith.constant 0 : index
    %84 = vector.load %arg10[%c0_46, %c0_47] : memref<144x256xf32, #tpu.memory_space<vmem>>, vector<144x256xf32>
    %cst_48 = arith.constant dense<0.000000e+00> : vector<16x256xf32>
    %85 = tpu.matmul %83, %84, %cst_48 {dimension_numbers = #tpu.dot_dimension_numbers<[1], [0], [0], [1], [0, 0, 1, 1], [], []>} : vector<16x144xf32>, vector<144x256xf32>, vector<16x256xf32> -> vector<16x256xf32>
    %c0_49 = arith.constant 0 : index
    %c0_50 = arith.constant 0 : index
    %c0_51 = arith.constant 0 : index
    %86 = vector.load %arg6[%c0_49, %c0_50, %c0_51] : memref<26x16x1xf32, #tpu.memory_space<vmem>>, vector<1x16x1xf32>
    %87 = vector.shape_cast %86 : vector<1x16x1xf32> to vector<16x1xf32>
    %88 = vector.broadcast %87 : vector<16x1xf32> to vector<16x256xf32>
    %89 = arith.addf %85, %88 : vector<16x256xf32>
    %cst_52 = arith.constant 0.000000e+00 : f32
    %90 = vector.broadcast %cst_52 : f32 to vector<16x256xf32>
    %91 = arith.maximumf %89, %90 : vector<16x256xf32>
    %c0_53 = arith.constant 0 : index
    %c0_54 = arith.constant 0 : index
    %92 = vector.load %arg8[%c0_53, %c0_54] : memref<16x256xf32, #tpu.memory_space<vmem>>, vector<16x256xf32>
    tpu.vector_store %arg8[%c0_53, %c0_54], %91 {strides = array<i32>} : memref<16x256xf32, #tpu.memory_space<vmem>>, vector<16x256xf32>,
    %c0_55 = arith.constant 0 : index
    %c0_56 = arith.constant 0 : index
    %93 = vector.load %arg8[%c0_55, %c0_56] : memref<16x256xf32, #tpu.memory_space<vmem>>, vector<16x256xf32>
    %c0_57 = arith.constant 0 : index
    %c0_58 = arith.constant 0 : index
    %94 = vector.load %arg9[%c0_57, %c0_58] : memref<16x256xf32, #tpu.memory_space<vmem>>, vector<16x256xf32>
    tpu.vector_store %arg9[%c0_57, %c0_58], %93 {strides = array<i32>} : memref<16x256xf32, #tpu.memory_space<vmem>>, vector<16x256xf32>,
    %c1_i32_59 = arith.constant 1 : i32
    %c24_i32 = arith.constant 24 : i32
    %95 = arith.addi %c1_i32_59, %c24_i32 : i32
    %c1_i32_60 = arith.constant 1 : i32
    scf.for %arg11 = %c1_i32_59 to %95 step %c1_i32_60  : i32 {
      %c0_107 = arith.constant 0 : index
      %c0_108 = arith.constant 0 : index
      %150 = vector.load %arg8[%c0_107, %c0_108] : memref<16x256xf32, #tpu.memory_space<vmem>>, vector<16x256xf32>
      %c17_i32_109 = arith.constant 17 : i32
      %151 = tpu.dynamic_rotate %150 by %c17_i32_109 dim 1 : vector<16x256xf32>, i32 -> vector<16x256xf32>
      %152 = vector.broadcast %5 : vector<1x256xf32> to vector<16x256xf32>
      %153 = arith.mulf %151, %152 : vector<16x256xf32>
      %c0_110 = arith.constant 0 : index
      %c0_111 = arith.constant 0 : index
      %154 = vector.load %arg10[%c0_110, %c0_111] : memref<144x256xf32, #tpu.memory_space<vmem>>, vector<16x256xf32>
      tpu.vector_store %arg10[%c0_110, %c0_111], %153 {strides = array<i32>} : memref<144x256xf32, #tpu.memory_space<vmem>>, vector<16x256xf32>,
      %c16_i32_112 = arith.constant 16 : i32
      %155 = tpu.dynamic_rotate %150 by %c16_i32_112 dim 1 : vector<16x256xf32>, i32 -> vector<16x256xf32>
      %156 = vector.broadcast %7 : vector<1x256xf32> to vector<16x256xf32>
      %157 = arith.mulf %155, %156 : vector<16x256xf32>
      %c16_113 = arith.constant 16 : index
      %c0_114 = arith.constant 0 : index
      %158 = vector.load %arg10[%c16_113, %c0_114] : memref<144x256xf32, #tpu.memory_space<vmem>>, vector<16x256xf32>
      tpu.vector_store %arg10[%c16_113, %c0_114], %157 {strides = array<i32>} : memref<144x256xf32, #tpu.memory_space<vmem>>, vector<16x256xf32>,
      %c15_i32_115 = arith.constant 15 : i32
      %159 = tpu.dynamic_rotate %150 by %c15_i32_115 dim 1 : vector<16x256xf32>, i32 -> vector<16x256xf32>
      %160 = vector.broadcast %9 : vector<1x256xf32> to vector<16x256xf32>
      %161 = arith.mulf %159, %160 : vector<16x256xf32>
      %c32_116 = arith.constant 32 : index
      %c0_117 = arith.constant 0 : index
      %162 = vector.load %arg10[%c32_116, %c0_117] : memref<144x256xf32, #tpu.memory_space<vmem>>, vector<16x256xf32>
      tpu.vector_store %arg10[%c32_116, %c0_117], %161 {strides = array<i32>} : memref<144x256xf32, #tpu.memory_space<vmem>>, vector<16x256xf32>,
      %c1_i32_118 = arith.constant 1 : i32
      %163 = tpu.dynamic_rotate %150 by %c1_i32_118 dim 1 : vector<16x256xf32>, i32 -> vector<16x256xf32>
      %164 = vector.broadcast %11 : vector<1x256xf32> to vector<16x256xf32>
      %165 = arith.mulf %163, %164 : vector<16x256xf32>
      %c48_119 = arith.constant 48 : index
      %c0_120 = arith.constant 0 : index
      %166 = vector.load %arg10[%c48_119, %c0_120] : memref<144x256xf32, #tpu.memory_space<vmem>>, vector<16x256xf32>
      tpu.vector_store %arg10[%c48_119, %c0_120], %165 {strides = array<i32>} : memref<144x256xf32, #tpu.memory_space<vmem>>, vector<16x256xf32>,
      %167 = vector.broadcast %13 : vector<1x256xf32> to vector<16x256xf32>
      %168 = arith.mulf %150, %167 : vector<16x256xf32>
      %c64_121 = arith.constant 64 : index
      %c0_122 = arith.constant 0 : index
      %169 = vector.load %arg10[%c64_121, %c0_122] : memref<144x256xf32, #tpu.memory_space<vmem>>, vector<16x256xf32>
      tpu.vector_store %arg10[%c64_121, %c0_122], %168 {strides = array<i32>} : memref<144x256xf32, #tpu.memory_space<vmem>>, vector<16x256xf32>,
      %c255_i32_123 = arith.constant 255 : i32
      %170 = tpu.dynamic_rotate %150 by %c255_i32_123 dim 1 : vector<16x256xf32>, i32 -> vector<16x256xf32>
      %171 = vector.broadcast %15 : vector<1x256xf32> to vector<16x256xf32>
      %172 = arith.mulf %170, %171 : vector<16x256xf32>
      %c80_124 = arith.constant 80 : index
      %c0_125 = arith.constant 0 : index
      %173 = vector.load %arg10[%c80_124, %c0_125] : memref<144x256xf32, #tpu.memory_space<vmem>>, vector<16x256xf32>
      tpu.vector_store %arg10[%c80_124, %c0_125], %172 {strides = array<i32>} : memref<144x256xf32, #tpu.memory_space<vmem>>, vector<16x256xf32>,
      %c241_i32_126 = arith.constant 241 : i32
      %174 = tpu.dynamic_rotate %150 by %c241_i32_126 dim 1 : vector<16x256xf32>, i32 -> vector<16x256xf32>
      %175 = vector.broadcast %17 : vector<1x256xf32> to vector<16x256xf32>
      %176 = arith.mulf %174, %175 : vector<16x256xf32>
      %c96_127 = arith.constant 96 : index
      %c0_128 = arith.constant 0 : index
      %177 = vector.load %arg10[%c96_127, %c0_128] : memref<144x256xf32, #tpu.memory_space<vmem>>, vector<16x256xf32>
      tpu.vector_store %arg10[%c96_127, %c0_128], %176 {strides = array<i32>} : memref<144x256xf32, #tpu.memory_space<vmem>>, vector<16x256xf32>,
      %c240_i32_129 = arith.constant 240 : i32
      %178 = tpu.dynamic_rotate %150 by %c240_i32_129 dim 1 : vector<16x256xf32>, i32 -> vector<16x256xf32>
      %179 = vector.broadcast %19 : vector<1x256xf32> to vector<16x256xf32>
      %180 = arith.mulf %178, %179 : vector<16x256xf32>
      %c112_130 = arith.constant 112 : index
      %c0_131 = arith.constant 0 : index
      %181 = vector.load %arg10[%c112_130, %c0_131] : memref<144x256xf32, #tpu.memory_space<vmem>>, vector<16x256xf32>
      tpu.vector_store %arg10[%c112_130, %c0_131], %180 {strides = array<i32>} : memref<144x256xf32, #tpu.memory_space<vmem>>, vector<16x256xf32>,
      %c239_i32_132 = arith.constant 239 : i32
      %182 = tpu.dynamic_rotate %150 by %c239_i32_132 dim 1 : vector<16x256xf32>, i32 -> vector<16x256xf32>
      %183 = vector.broadcast %21 : vector<1x256xf32> to vector<16x256xf32>
      %184 = arith.mulf %182, %183 : vector<16x256xf32>
      %c128_133 = arith.constant 128 : index
      %c0_134 = arith.constant 0 : index
      %185 = vector.load %arg10[%c128_133, %c0_134] : memref<144x256xf32, #tpu.memory_space<vmem>>, vector<16x256xf32>
      tpu.vector_store %arg10[%c128_133, %c0_134], %184 {strides = array<i32>} : memref<144x256xf32, #tpu.memory_space<vmem>>, vector<16x256xf32>,
      %186 = arith.index_cast %arg11 : i32 to index
      %c0_135 = arith.constant 0 : index
      %c0_136 = arith.constant 0 : index
      %187 = vector.load %arg5[%186, %c0_135, %c0_136] : memref<26x16x144xf32, #tpu.memory_space<vmem>>, vector<1x16x144xf32>
      %188 = vector.shape_cast %187 : vector<1x16x144xf32> to vector<16x144xf32>
      %c0_137 = arith.constant 0 : index
      %c0_138 = arith.constant 0 : index
      %189 = vector.load %arg10[%c0_137, %c0_138] : memref<144x256xf32, #tpu.memory_space<vmem>>, vector<144x256xf32>
      %cst_139 = arith.constant dense<0.000000e+00> : vector<16x256xf32>
      %190 = tpu.matmul %188, %189, %cst_139 {dimension_numbers = #tpu.dot_dimension_numbers<[1], [0], [0], [1], [0, 0, 1, 1], [], []>} : vector<16x144xf32>, vector<144x256xf32>, vector<16x256xf32> -> vector<16x256xf32>
      %191 = arith.index_cast %arg11 : i32 to index
      %c0_140 = arith.constant 0 : index
      %c0_141 = arith.constant 0 : index
      %192 = vector.load %arg6[%191, %c0_140, %c0_141] : memref<26x16x1xf32, #tpu.memory_space<vmem>>, vector<1x16x1xf32>
      %193 = vector.shape_cast %192 : vector<1x16x1xf32> to vector<16x1xf32>
      %194 = vector.broadcast %193 : vector<16x1xf32> to vector<16x256xf32>
      %195 = arith.addf %190, %194 : vector<16x256xf32>
      %cst_142 = arith.constant 0.000000e+00 : f32
      %196 = vector.broadcast %cst_142 : f32 to vector<16x256xf32>
      %197 = arith.maximumf %195, %196 : vector<16x256xf32>
      %c0_143 = arith.constant 0 : index
      %c0_144 = arith.constant 0 : index
      %198 = vector.load %arg8[%c0_143, %c0_144] : memref<16x256xf32, #tpu.memory_space<vmem>>, vector<16x256xf32>
      tpu.vector_store %arg8[%c0_143, %c0_144], %197 {strides = array<i32>} : memref<16x256xf32, #tpu.memory_space<vmem>>, vector<16x256xf32>,
    }
    %c24_i32_61 = arith.constant 24 : i32
    %c0_62 = arith.constant 0 : index
    %c0_63 = arith.constant 0 : index
    %96 = vector.load %arg8[%c0_62, %c0_63] : memref<16x256xf32, #tpu.memory_space<vmem>>, vector<16x256xf32>
    %c0_64 = arith.constant 0 : index
    %c0_65 = arith.constant 0 : index
    %97 = vector.load %arg9[%c0_64, %c0_65] : memref<16x256xf32, #tpu.memory_space<vmem>>, vector<16x256xf32>
    %98 = arith.addf %96, %97 : vector<16x256xf32>
    %c0_66 = arith.constant 0 : index
    %c0_67 = arith.constant 0 : index
    %99 = vector.load %arg8[%c0_66, %c0_67] : memref<16x256xf32, #tpu.memory_space<vmem>>, vector<16x256xf32>
    tpu.vector_store %arg8[%c0_66, %c0_67], %98 {strides = array<i32>} : memref<16x256xf32, #tpu.memory_space<vmem>>, vector<16x256xf32>,
    %c0_68 = arith.constant 0 : index
    %c0_69 = arith.constant 0 : index
    %100 = vector.load %arg8[%c0_68, %c0_69] : memref<16x256xf32, #tpu.memory_space<vmem>>, vector<16x256xf32>
    %c17_i32_70 = arith.constant 17 : i32
    %101 = tpu.dynamic_rotate %100 by %c17_i32_70 dim 1 : vector<16x256xf32>, i32 -> vector<16x256xf32>
    %102 = vector.broadcast %5 : vector<1x256xf32> to vector<16x256xf32>
    %103 = arith.mulf %101, %102 : vector<16x256xf32>
    %c0_71 = arith.constant 0 : index
    %c0_72 = arith.constant 0 : index
    %104 = vector.load %arg10[%c0_71, %c0_72] : memref<144x256xf32, #tpu.memory_space<vmem>>, vector<16x256xf32>
    tpu.vector_store %arg10[%c0_71, %c0_72], %103 {strides = array<i32>} : memref<144x256xf32, #tpu.memory_space<vmem>>, vector<16x256xf32>,
    %c16_i32_73 = arith.constant 16 : i32
    %105 = tpu.dynamic_rotate %100 by %c16_i32_73 dim 1 : vector<16x256xf32>, i32 -> vector<16x256xf32>
    %106 = vector.broadcast %7 : vector<1x256xf32> to vector<16x256xf32>
    %107 = arith.mulf %105, %106 : vector<16x256xf32>
    %c16_74 = arith.constant 16 : index
    %c0_75 = arith.constant 0 : index
    %108 = vector.load %arg10[%c16_74, %c0_75] : memref<144x256xf32, #tpu.memory_space<vmem>>, vector<16x256xf32>
    tpu.vector_store %arg10[%c16_74, %c0_75], %107 {strides = array<i32>} : memref<144x256xf32, #tpu.memory_space<vmem>>, vector<16x256xf32>,
    %c15_i32_76 = arith.constant 15 : i32
    %109 = tpu.dynamic_rotate %100 by %c15_i32_76 dim 1 : vector<16x256xf32>, i32 -> vector<16x256xf32>
    %110 = vector.broadcast %9 : vector<1x256xf32> to vector<16x256xf32>
    %111 = arith.mulf %109, %110 : vector<16x256xf32>
    %c32_77 = arith.constant 32 : index
    %c0_78 = arith.constant 0 : index
    %112 = vector.load %arg10[%c32_77, %c0_78] : memref<144x256xf32, #tpu.memory_space<vmem>>, vector<16x256xf32>
    tpu.vector_store %arg10[%c32_77, %c0_78], %111 {strides = array<i32>} : memref<144x256xf32, #tpu.memory_space<vmem>>, vector<16x256xf32>,
    %c1_i32_79 = arith.constant 1 : i32
    %113 = tpu.dynamic_rotate %100 by %c1_i32_79 dim 1 : vector<16x256xf32>, i32 -> vector<16x256xf32>
    %114 = vector.broadcast %11 : vector<1x256xf32> to vector<16x256xf32>
    %115 = arith.mulf %113, %114 : vector<16x256xf32>
    %c48_80 = arith.constant 48 : index
    %c0_81 = arith.constant 0 : index
    %116 = vector.load %arg10[%c48_80, %c0_81] : memref<144x256xf32, #tpu.memory_space<vmem>>, vector<16x256xf32>
    tpu.vector_store %arg10[%c48_80, %c0_81], %115 {strides = array<i32>} : memref<144x256xf32, #tpu.memory_space<vmem>>, vector<16x256xf32>,
    %117 = vector.broadcast %13 : vector<1x256xf32> to vector<16x256xf32>
    %118 = arith.mulf %100, %117 : vector<16x256xf32>
    %c64_82 = arith.constant 64 : index
    %c0_83 = arith.constant 0 : index
    %119 = vector.load %arg10[%c64_82, %c0_83] : memref<144x256xf32, #tpu.memory_space<vmem>>, vector<16x256xf32>
    tpu.vector_store %arg10[%c64_82, %c0_83], %118 {strides = array<i32>} : memref<144x256xf32, #tpu.memory_space<vmem>>, vector<16x256xf32>,
    %c255_i32_84 = arith.constant 255 : i32
    %120 = tpu.dynamic_rotate %100 by %c255_i32_84 dim 1 : vector<16x256xf32>, i32 -> vector<16x256xf32>
    %121 = vector.broadcast %15 : vector<1x256xf32> to vector<16x256xf32>
    %122 = arith.mulf %120, %121 : vector<16x256xf32>
    %c80_85 = arith.constant 80 : index
    %c0_86 = arith.constant 0 : index
    %123 = vector.load %arg10[%c80_85, %c0_86] : memref<144x256xf32, #tpu.memory_space<vmem>>, vector<16x256xf32>
    tpu.vector_store %arg10[%c80_85, %c0_86], %122 {strides = array<i32>} : memref<144x256xf32, #tpu.memory_space<vmem>>, vector<16x256xf32>,
    %c241_i32_87 = arith.constant 241 : i32
    %124 = tpu.dynamic_rotate %100 by %c241_i32_87 dim 1 : vector<16x256xf32>, i32 -> vector<16x256xf32>
    %125 = vector.broadcast %17 : vector<1x256xf32> to vector<16x256xf32>
    %126 = arith.mulf %124, %125 : vector<16x256xf32>
    %c96_88 = arith.constant 96 : index
    %c0_89 = arith.constant 0 : index
    %127 = vector.load %arg10[%c96_88, %c0_89] : memref<144x256xf32, #tpu.memory_space<vmem>>, vector<16x256xf32>
    tpu.vector_store %arg10[%c96_88, %c0_89], %126 {strides = array<i32>} : memref<144x256xf32, #tpu.memory_space<vmem>>, vector<16x256xf32>,
    %c240_i32_90 = arith.constant 240 : i32
    %128 = tpu.dynamic_rotate %100 by %c240_i32_90 dim 1 : vector<16x256xf32>, i32 -> vector<16x256xf32>
    %129 = vector.broadcast %19 : vector<1x256xf32> to vector<16x256xf32>
    %130 = arith.mulf %128, %129 : vector<16x256xf32>
    %c112_91 = arith.constant 112 : index
    %c0_92 = arith.constant 0 : index
    %131 = vector.load %arg10[%c112_91, %c0_92] : memref<144x256xf32, #tpu.memory_space<vmem>>, vector<16x256xf32>
    tpu.vector_store %arg10[%c112_91, %c0_92], %130 {strides = array<i32>} : memref<144x256xf32, #tpu.memory_space<vmem>>, vector<16x256xf32>,
    %c239_i32_93 = arith.constant 239 : i32
    %132 = tpu.dynamic_rotate %100 by %c239_i32_93 dim 1 : vector<16x256xf32>, i32 -> vector<16x256xf32>
    %133 = vector.broadcast %21 : vector<1x256xf32> to vector<16x256xf32>
    %134 = arith.mulf %132, %133 : vector<16x256xf32>
    %c128_94 = arith.constant 128 : index
    %c0_95 = arith.constant 0 : index
    %135 = vector.load %arg10[%c128_94, %c0_95] : memref<144x256xf32, #tpu.memory_space<vmem>>, vector<16x256xf32>
    tpu.vector_store %arg10[%c128_94, %c0_95], %134 {strides = array<i32>} : memref<144x256xf32, #tpu.memory_space<vmem>>, vector<16x256xf32>,
    %c25 = arith.constant 25 : index
    %c0_96 = arith.constant 0 : index
    %c0_97 = arith.constant 0 : index
    %136 = vector.load %arg5[%c25, %c0_96, %c0_97] : memref<26x16x144xf32, #tpu.memory_space<vmem>>, vector<1x16x144xf32>
    %137 = vector.shape_cast %136 : vector<1x16x144xf32> to vector<16x144xf32>
    %c0_98 = arith.constant 0 : index
    %c0_99 = arith.constant 0 : index
    %138 = vector.load %arg10[%c0_98, %c0_99] : memref<144x256xf32, #tpu.memory_space<vmem>>, vector<144x256xf32>
    %cst_100 = arith.constant dense<0.000000e+00> : vector<16x256xf32>
    %139 = tpu.matmul %137, %138, %cst_100 {dimension_numbers = #tpu.dot_dimension_numbers<[1], [0], [0], [1], [0, 0, 1, 1], [], []>} : vector<16x144xf32>, vector<144x256xf32>, vector<16x256xf32> -> vector<16x256xf32>
    %c25_101 = arith.constant 25 : index
    %c0_102 = arith.constant 0 : index
    %c0_103 = arith.constant 0 : index
    %140 = vector.load %arg6[%c25_101, %c0_102, %c0_103] : memref<26x16x1xf32, #tpu.memory_space<vmem>>, vector<1x16x1xf32>
    %141 = vector.shape_cast %140 : vector<1x16x1xf32> to vector<16x1xf32>
    %142 = vector.broadcast %141 : vector<16x1xf32> to vector<16x256xf32>
    %143 = arith.addf %139, %142 : vector<16x256xf32>
    %144 = vector.extract_strided_slice %1 {offsets = [0, 0], sizes = [3, 256], strides = [1, 1]} : vector<16x256xf32> to vector<3x256xf32>
    %145 = vector.extract_strided_slice %143 {offsets = [0, 0], sizes = [3, 256], strides = [1, 1]} : vector<16x256xf32> to vector<3x256xf32>
    %146 = arith.addf %144, %145 : vector<3x256xf32>
    %c0_104 = arith.constant 0 : index
    %c0_105 = arith.constant 0 : index
    %c0_106 = arith.constant 0 : index
    %147 = vector.load %arg7[%c0_104, %c0_105, %c0_106] : memref<1x3x256xf32, #tpu.memory_space<vmem>>, vector<1x3x256xf32>
    %148 = vector.shape_cast %147 : vector<1x3x256xf32> to vector<3x256xf32>
    %149 = vector.shape_cast %146 : vector<3x256xf32> to vector<1x3x256xf32>
    tpu.vector_store %arg7[%c0_104, %c0_105, %c0_106], %149 {strides = array<i32>} : memref<1x3x256xf32, #tpu.memory_space<vmem>>, vector<1x3x256xf32>,
    return
  }
  func.func @transform_0(%arg0: i32) -> (i32, i32, i32) {
    %c0_i32 = arith.constant 0 : i32
    %c0_i32_0 = arith.constant 0 : i32
    %c0_i32_1 = arith.constant 0 : i32
    return %arg0, %c0_i32, %c0_i32_0 : i32, i32, i32
  }
  func.func @transform_1(%arg0: i32) -> (i32, i32) {
    %c0_i32 = arith.constant 0 : i32
    %c0_i32_0 = arith.constant 0 : i32
    %c0_i32_1 = arith.constant 0 : i32
    return %c0_i32, %c0_i32_0 : i32, i32
  }
  func.func @transform_2(%arg0: i32) -> (i32, i32) {
    %c0_i32 = arith.constant 0 : i32
    %c0_i32_0 = arith.constant 0 : i32
    %c0_i32_1 = arith.constant 0 : i32
    return %c0_i32, %c0_i32_0 : i32, i32
  }
  func.func @transform_3(%arg0: i32) -> (i32, i32, i32) {
    %c0_i32 = arith.constant 0 : i32
    %c0_i32_0 = arith.constant 0 : i32
    %c0_i32_1 = arith.constant 0 : i32
    %c0_i32_2 = arith.constant 0 : i32
    return %c0_i32, %c0_i32_0, %c0_i32_1 : i32, i32, i32
  }
  func.func @transform_4(%arg0: i32) -> (i32, i32, i32) {
    %c0_i32 = arith.constant 0 : i32
    %c0_i32_0 = arith.constant 0 : i32
    %c0_i32_1 = arith.constant 0 : i32
    %c0_i32_2 = arith.constant 0 : i32
    return %c0_i32, %c0_i32_0, %c0_i32_1 : i32, i32, i32
  }
  func.func @transform_5(%arg0: i32) -> (i32, i32, i32) {
    %c0_i32 = arith.constant 0 : i32
    %c0_i32_0 = arith.constant 0 : i32
    %c0_i32_1 = arith.constant 0 : i32
    %c0_i32_2 = arith.constant 0 : i32
    return %c0_i32, %c0_i32_0, %c0_i32_1 : i32, i32, i32
  }
  func.func @transform_6(%arg0: i32) -> (i32, i32, i32) {
    %c0_i32 = arith.constant 0 : i32
    %c0_i32_0 = arith.constant 0 : i32
    %c0_i32_1 = arith.constant 0 : i32
    return %arg0, %c0_i32, %c0_i32_0 : i32, i32, i32
  }
}

</mosaic_0001>

<llo_original>
// kernel: _lambda_.1
$region0: #{_lambda_.1}
  #allocation0 [shape = 'u32[]', space=smem, size = 0x4, offset = 0x4, fixed_abs, tag = 'smem constant byte address 0x4 - core index']
  #allocation1 [shape = 'u32[144,128]{1,0:T(1,128)}', space=vmem, size = 0x12000, scoped, tag = 'internal scratch']
  #allocation2 [shape = 'f32[16,256]{1,0:T(8,128)}', space=vmem, size = 0x4000, scoped, tag = 'scratch operand']
  #allocation3 [shape = 'f32[16,256]{1,0:T(8,128)}', space=vmem, size = 0x4000, scoped, tag = 'scratch operand']
  #allocation4 [shape = 'f32[144,256]{1,0:T(8,128)}', space=vmem, size = 0x24000, scoped, tag = 'scratch operand']
  %s0 = inlined_call_operand.vmem [shape: f32[2,16,256], index: 0, kind: input, shape index: {}]
  %s1 = inlined_call_operand.vmem [shape: f32[256,256], index: 1, kind: input, shape index: {}]
  %s2 = inlined_call_operand.vmem [shape: f32[1,256], index: 2, kind: input, shape index: {}]
  %s3 = inlined_call_operand.vmem [shape: f32[9,1,256], index: 3, kind: input, shape index: {}]
  %s4 = inlined_call_operand.vmem [shape: f32[26,16,144], index: 4, kind: input, shape index: {}]
  %s5 = inlined_call_operand.vmem [shape: f32[26,16,1], index: 5, kind: input, shape index: {}]
  %s6 = inlined_call_operand.vmem [shape: f32[2,3,256], index: 6, kind: output, shape index: {}]
  %s7 = sld [smem:[#allocation0]]
  $region64: #{_lambda_.1} parent=0
    _
  %s9 = ssub.s32 1, %s7
  %s10 = scalar_select 0, %s9, %s7
  loop: start=0, step=1, limit=4
  $region2: #{_lambda_.1} parent=0 // loop_pre_header
    _
  $region3: #{_lambda_.1} parent=0 // loop_header
    %s12 = sphi 0, %s16
    %p13 = scmp.ge.s32.totalorder %s12, 4
    %s22 = sphi 0, %s24
    %s25 = sphi 0, %s22
    %s26 = sphi 0, %s25
    %s42 = sphi 0, %s26
    %s46 = sphi 0, %s46
    %s48 = sphi 0, %s46
    %s49 = sphi 0, %s48
    %s63 = sphi 0, %s49
    %s67 = sphi 0, %s67
    %s69 = sphi 0, %s67
    %s70 = sphi 0, %s69
    %s84 = sphi 0, %s70
    %s88 = sphi 0, %s88
    %s90 = sphi 0, %s88
    %s91 = sphi 0, %s90
    %s105 = sphi 0, %s91
    %s109 = sphi 0, %s109
    %s111 = sphi 0, %s109
    %s112 = sphi 0, %s111
    %s126 = sphi 0, %s112
    %s130 = sphi 0, %s130
    %s132 = sphi 0, %s130
    %s133 = sphi 0, %s132
    %s147 = sphi 0, %s133
    %s153 = sphi 0, %s155
    %s156 = sphi 0, %s153
    %s157 = sphi 0, %s156
    %s173 = sphi 0, %s157
  $region4: #{_lambda_.1} parent=0 // loop_header_branch
    %15 = sbr.rel (%p13) target = $region8
  $region5: #{_lambda_.1} parent=0 // loop_body
    %s17 = ssub.s32 %s12, 1
    %s18 = ssub.s32 %s12, 2
    %s19 = sadd.s32 %s12, 1
    %s20 = ssub.s32 %s12, %s19
    %p21 = scmp.eq.s32.totalorder %s20, 0
    %s23 = sadd.s32 %s22, 1
    %s24 = scalar_select %p21, %s22, %s23
    %p27 = pneg %p21
    %p28 = scmp.eq.s32.totalorder %s12, 1
    %p29 = por %p27, %p28
    %p30 = scmp.ne.s32.totalorder %s22, %s25
    %p31 = scmp.eq.s32.totalorder %s12, 0
    %p32 = por %p30, %p31
    %p33 = scmp.ne.s32.totalorder %s22, %s25
    %p34 = scmp.eq.s32.totalorder %s17, 1
    %p35 = por %p33, %p34
    %p36 = scmp.ne.s32.totalorder %s25, %s26
    %p37 = scmp.eq.s32.totalorder %s17, 0
    %p38 = por %p36, %p37
    %p39 = scmp.ne.s32.totalorder %s25, %s26
    %p40 = scmp.eq.s32.totalorder %s18, 1
    %p41 = por %p39, %p40
    %p43 = scmp.ne.s32.totalorder %s26, %s42
    %p44 = scmp.eq.s32.totalorder %s18, 0
    %p45 = por %p43, %p44
    %s47 = sadd.s32 %s46, 1
    %p50 = scmp.eq.s32.totalorder %s12, 1
    %p51 = scmp.ne.s32.totalorder %s46, %s48
    %p52 = scmp.eq.s32.totalorder %s12, 0
    %p53 = por %p51, %p52
    %p54 = scmp.ne.s32.totalorder %s46, %s48
    %p55 = scmp.eq.s32.totalorder %s17, 1
    %p56 = por %p54, %p55
    %p57 = scmp.ne.s32.totalorder %s48, %s49
    %p58 = scmp.eq.s32.totalorder %s17, 0
    %p59 = por %p57, %p58
    %p60 = scmp.ne.s32.totalorder %s48, %s49
    %p61 = scmp.eq.s32.totalorder %s18, 1
    %p62 = por %p60, %p61
    %p64 = scmp.ne.s32.totalorder %s49, %s63
    %p65 = scmp.eq.s32.totalorder %s18, 0
    %p66 = por %p64, %p65
    %s68 = sadd.s32 %s67, 1
    %p71 = scmp.eq.s32.totalorder %s12, 1
    %p72 = scmp.ne.s32.totalorder %s67, %s69
    %p73 = scmp.eq.s32.totalorder %s12, 0
    %p74 = por %p72, %p73
    %p75 = scmp.ne.s32.totalorder %s67, %s69
    %p76 = scmp.eq.s32.totalorder %s17, 1
    %p77 = por %p75, %p76
    %p78 = scmp.ne.s32.totalorder %s69, %s70
    %p79 = scmp.eq.s32.totalorder %s17, 0
    %p80 = por %p78, %p79
    %p81 = scmp.ne.s32.totalorder %s69, %s70
    %p82 = scmp.eq.s32.totalorder %s18, 1
    %p83 = por %p81, %p82
    %p85 = scmp.ne.s32.totalorder %s70, %s84
    %p86 = scmp.eq.s32.totalorder %s18, 0
    %p87 = por %p85, %p86
    %s89 = sadd.s32 %s88, 1
    %p92 = scmp.eq.s32.totalorder %s12, 1
    %p93 = scmp.ne.s32.totalorder %s88, %s90
    %p94 = scmp.eq.s32.totalorder %s12, 0
    %p95 = por %p93, %p94
    %p96 = scmp.ne.s32.totalorder %s88, %s90
    %p97 = scmp.eq.s32.totalorder %s17, 1
    %p98 = por %p96, %p97
    %p99 = scmp.ne.s32.totalorder %s90, %s91
    %p100 = scmp.eq.s32.totalorder %s17, 0
    %p101 = por %p99, %p100
    %p102 = scmp.ne.s32.totalorder %s90, %s91
    %p103 = scmp.eq.s32.totalorder %s18, 1
    %p104 = por %p102, %p103
    %p106 = scmp.ne.s32.totalorder %s91, %s105
    %p107 = scmp.eq.s32.totalorder %s18, 0
    %p108 = por %p106, %p107
    %s110 = sadd.s32 %s109, 1
    %p113 = scmp.eq.s32.totalorder %s12, 1
    %p114 = scmp.ne.s32.totalorder %s109, %s111
    %p115 = scmp.eq.s32.totalorder %s12, 0
    %p116 = por %p114, %p115
    %p117 = scmp.ne.s32.totalorder %s109, %s111
    %p118 = scmp.eq.s32.totalorder %s17, 1
    %p119 = por %p117, %p118
    %p120 = scmp.ne.s32.totalorder %s111, %s112
    %p121 = scmp.eq.s32.totalorder %s17, 0
    %p122 = por %p120, %p121
    %p123 = scmp.ne.s32.totalorder %s111, %s112
    %p124 = scmp.eq.s32.totalorder %s18, 1
    %p125 = por %p123, %p124
    %p127 = scmp.ne.s32.totalorder %s112, %s126
    %p128 = scmp.eq.s32.totalorder %s18, 0
    %p129 = por %p127, %p128
    %s131 = sadd.s32 %s130, 1
    %p134 = scmp.eq.s32.totalorder %s12, 1
    %p135 = scmp.ne.s32.totalorder %s130, %s132
    %p136 = scmp.eq.s32.totalorder %s12, 0
    %p137 = por %p135, %p136
    %p138 = scmp.ne.s32.totalorder %s130, %s132
    %p139 = scmp.eq.s32.totalorder %s17, 1
    %p140 = por %p138, %p139
    %p141 = scmp.ne.s32.totalorder %s132, %s133
    %p142 = scmp.eq.s32.totalorder %s17, 0
    %p143 = por %p141, %p142
    %p144 = scmp.ne.s32.totalorder %s132, %s133
    %p145 = scmp.eq.s32.totalorder %s18, 1
    %p146 = por %p144, %p145
    %p148 = scmp.ne.s32.totalorder %s133, %s147
    %p149 = scmp.eq.s32.totalorder %s18, 0
    %p150 = por %p148, %p149
    %s151 = ssub.s32 %s12, %s19
    %p152 = scmp.eq.s32.totalorder %s151, 0
    %s154 = sadd.s32 %s153, 1
    %s155 = scalar_select %p152, %s153, %s154
    %p158 = pneg %p152
    %p159 = scmp.eq.s32.totalorder %s12, 1
    %p160 = por %p158, %p159
    %p161 = scmp.ne.s32.totalorder %s153, %s156
    %p162 = scmp.eq.s32.totalorder %s12, 0
    %p163 = por %p161, %p162
    %p164 = scmp.ne.s32.totalorder %s153, %s156
    %p165 = scmp.eq.s32.totalorder %s17, 1
    %p166 = por %p164, %p165
    %p167 = scmp.ne.s32.totalorder %s156, %s157
    %p168 = scmp.eq.s32.totalorder %s17, 0
    %p169 = por %p167, %p168
    %p170 = scmp.ne.s32.totalorder %s156, %s157
    %p171 = scmp.eq.s32.totalorder %s18, 1
    %p172 = por %p170, %p171
    %p174 = scmp.ne.s32.totalorder %s157, %s173
    %p175 = scmp.eq.s32.totalorder %s18, 0
    %p176 = por %p174, %p175
    %p177 = scmp.le.s32.totalorder 1, %s12
    %p178 = scmp.lt.s32.totalorder %s12, 3
    %p179 = pnand %p177, %p178
    %p180 = pneg %p179
    // Predicated region
    $region9: #{_lambda_.1} parent=5 // pred_check
      _
    $region10: #{_lambda_.1} parent=5 // pred_check_branch
      %182 = sbr.rel (%p179) target = $region12
    $region11: #{_lambda_.1} parent=5 // pred_region
      %s183 = ssub.s32 %s12, 1
      // Predicated region
      $region13: #{_lambda_.1} parent=11 // pred_check
        %p184 = pneg %p59
      $region14: #{_lambda_.1} parent=11 // pred_check_branch
        %186 = sbr.rel (%p184) target = $region16
      $region15: #{_lambda_.1} parent=11 // pred_region
        _
      $region16: #{_lambda_.1} parent=11 // pred_fallthru
        _
      // Predicated region
      $region17: #{_lambda_.1} parent=11 // pred_check
        %p187 = pneg %p80
      $region18: #{_lambda_.1} parent=11 // pred_check_branch
        %189 = sbr.rel (%p187) target = $region20
      $region19: #{_lambda_.1} parent=11 // pred_region
        _
      $region20: #{_lambda_.1} parent=11 // pred_fallthru
        _
      // Predicated region
      $region21: #{_lambda_.1} parent=11 // pred_check
        %p190 = pneg %p101
      $region22: #{_lambda_.1} parent=11 // pred_check_branch
        %192 = sbr.rel (%p190) target = $region24
      $region23: #{_lambda_.1} parent=11 // pred_region
        _
      $region24: #{_lambda_.1} parent=11 // pred_fallthru
        _
      // Predicated region
      $region25: #{_lambda_.1} parent=11 // pred_check
        %p193 = pneg %p122
      $region26: #{_lambda_.1} parent=11 // pred_check_branch
        %195 = sbr.rel (%p193) target = $region28
      $region27: #{_lambda_.1} parent=11 // pred_region
        _
      $region28: #{_lambda_.1} parent=11 // pred_fallthru
        _
      // Predicated region
      $region29: #{_lambda_.1} parent=11 // pred_check
        %p196 = pneg %p143
      $region30: #{_lambda_.1} parent=11 // pred_check_branch
        %198 = sbr.rel (%p196) target = $region32
      $region31: #{_lambda_.1} parent=11 // pred_region
        _
      $region32: #{_lambda_.1} parent=11 // pred_fallthru
        _
    $region12: #{_lambda_.1} parent=5 // pred_fallthru
      _
    %p199 = scmp.lt.s32.totalorder %s12, 2
    // Predicated region
    $region33: #{_lambda_.1} parent=5 // pred_check
      %p200 = pneg %p199
    $region34: #{_lambda_.1} parent=5 // pred_check_branch
      %202 = sbr.rel (%p200) target = $region36
    $region35: #{_lambda_.1} parent=5 // pred_region
      // Predicated region
      $region37: #{_lambda_.1} parent=35 // pred_check
        %p203 = pneg %p32
      $region38: #{_lambda_.1} parent=35 // pred_check_branch
        %205 = sbr.rel (%p203) target = $region40
      $region39: #{_lambda_.1} parent=35 // pred_region
        %p206 = scmp.lt.s32.totalorder %s12, 1
        %s207 = scalar_select %p206, %s12, 1
        %s208 = smul.addr %s207, 4
        %s209 = smul.addr %s208, 8
        %s210 = scalar_lea.vmem %s0, %s209
      $region40: #{_lambda_.1} parent=35 // pred_fallthru
        _
    $region36: #{_lambda_.1} parent=5 // pred_fallthru
      _
    %p211 = scmp.le.s32.totalorder 1, %s12
    %p212 = scmp.lt.s32.totalorder %s12, 3
    %p213 = pnand %p211, %p212
    %p214 = pneg %p213
    // Predicated region
    $region41: #{_lambda_.1} parent=5 // pred_check
      _
    $region42: #{_lambda_.1} parent=5 // pred_check_branch
      %216 = sbr.rel (%p213) target = $region44
    $region43: #{_lambda_.1} parent=5 // pred_region
      %s217 = ssub.s32 %s12, 1
      %p218 = scmp.lt.s32.totalorder %s17, 1
      %s219 = scalar_select %p218, %s17, 1
      %s220 = smul.addr %s219, 4
      %s221 = smul.addr %s220, 8
      %s222 = scalar_lea.vmem %s0, %s221
      %p223 = pneg %p38
      %p224 = pneg %p35
      %p225 = pneg %p59
      %p226 = pneg %p56
      %p227 = pneg %p80
      %p228 = pneg %p77
      %p229 = pneg %p101
      %p230 = pneg %p98
      %p231 = pneg %p122
      %p232 = pneg %p119
      %p233 = pneg %p143
      %p234 = pneg %p140
      %p235 = pneg %p169
      %p236 = pneg %p166
      %p237 = scmp.lt.s32.totalorder %s17, 1
      %s238 = scalar_select %p237, %s17, 1
      %s239 = smul.addr %s238, 2
      %s240 = smul.addr %s239, 4
      %s241 = scalar_lea.vmem %s6, %s240
      %p242 = scmp.lt.s32.totalorder %s17, 1
      %s243 = scalar_select %p242, %s17, 1
      %s244 = smul.addr %s243, 4
      %s245 = smul.addr %s244, 8
      %s246 = scalar_lea.vmem %s0, %s245
      %p247 = scmp.lt.s32.totalorder %s17, 1
      %s248 = scalar_select %p247, %s17, 1
      %s249 = smul.addr %s248, 2
      %s250 = smul.addr %s249, 4
      %s251 = scalar_lea.vmem %s6, %s250
      %v252 = vld [vmem:[%s246] sm:$0xff]
      %v253 = vld [vmem:[%s246 + $0x8] sm:$0xff]
      %v254 = vld [vmem:[%s246 + $0x10] sm:$0xff]
      %v255 = vld [vmem:[%s246 + $0x18] sm:$0xff]
      %v256 = vld [vmem:[%s1] sm:$0xff]
      %v257 = vld [vmem:[%s1 + $0x8] sm:$0xff]
      %v258 = vld [vmem:[%s1 + $0x10] sm:$0xff]
      %v259 = vld [vmem:[%s1 + $0x18] sm:$0xff]
      %v260 = vld [vmem:[%s1 + $0x20] sm:$0xff]
      %v261 = vld [vmem:[%s1 + $0x28] sm:$0xff]
      %v262 = vld [vmem:[%s1 + $0x30] sm:$0xff]
      %v263 = vld [vmem:[%s1 + $0x38] sm:$0xff]
      %v264 = vld [vmem:[%s1 + $0x40] sm:$0xff]
      %v265 = vld [vmem:[%s1 + $0x48] sm:$0xff]
      %v266 = vld [vmem:[%s1 + $0x50] sm:$0xff]
      %v267 = vld [vmem:[%s1 + $0x58] sm:$0xff]
      %v268 = vld [vmem:[%s1 + $0x60] sm:$0xff]
      %v269 = vld [vmem:[%s1 + $0x68] sm:$0xff]
      %v270 = vld [vmem:[%s1 + $0x70] sm:$0xff]
      %v271 = vld [vmem:[%s1 + $0x78] sm:$0xff]
      %v272 = vld [vmem:[%s1 + $0x80] sm:$0xff]
      %v273 = vld [vmem:[%s1 + $0x88] sm:$0xff]
      %v274 = vld [vmem:[%s1 + $0x90] sm:$0xff]
      %v275 = vld [vmem:[%s1 + $0x98] sm:$0xff]
      %v276 = vld [vmem:[%s1 + $0xa0] sm:$0xff]
      %v277 = vld [vmem:[%s1 + $0xa8] sm:$0xff]
      %v278 = vld [vmem:[%s1 + $0xb0] sm:$0xff]
      %v279 = vld [vmem:[%s1 + $0xb8] sm:$0xff]
      %v280 = vld [vmem:[%s1 + $0xc0] sm:$0xff]
      %v281 = vld [vmem:[%s1 + $0xc8] sm:$0xff]
      %v282 = vld [vmem:[%s1 + $0xd0] sm:$0xff]
      %v283 = vld [vmem:[%s1 + $0xd8] sm:$0xff]
      %v284 = vld [vmem:[%s1 + $0xe0] sm:$0xff]
      %v285 = vld [vmem:[%s1 + $0xe8] sm:$0xff]
      %v286 = vld [vmem:[%s1 + $0xf0] sm:$0xff]
      %v287 = vld [vmem:[%s1 + $0xf8] sm:$0xff]
      %v288 = vld [vmem:[%s1 + $0x100] sm:$0xff]
      %v289 = vld [vmem:[%s1 + $0x108] sm:$0xff]
      %v290 = vld [vmem:[%s1 + $0x110] sm:$0xff]
      %v291 = vld [vmem:[%s1 + $0x118] sm:$0xff]
      %v292 = vld [vmem:[%s1 + $0x120] sm:$0xff]
      %v293 = vld [vmem:[%s1 + $0x128] sm:$0xff]
      %v294 = vld [vmem:[%s1 + $0x130] sm:$0xff]
      %v295 = vld [vmem:[%s1 + $0x138] sm:$0xff]
      %v296 = vld [vmem:[%s1 + $0x140] sm:$0xff]
      %v297 = vld [vmem:[%s1 + $0x148] sm:$0xff]
      %v298 = vld [vmem:[%s1 + $0x150] sm:$0xff]
      %v299 = vld [vmem:[%s1 + $0x158] sm:$0xff]
      %v300 = vld [vmem:[%s1 + $0x160] sm:$0xff]
      %v301 = vld [vmem:[%s1 + $0x168] sm:$0xff]
      %v302 = vld [vmem:[%s1 + $0x170] sm:$0xff]
      %v303 = vld [vmem:[%s1 + $0x178] sm:$0xff]
      %v304 = vld [vmem:[%s1 + $0x180] sm:$0xff]
      %v305 = vld [vmem:[%s1 + $0x188] sm:$0xff]
      %v306 = vld [vmem:[%s1 + $0x190] sm:$0xff]
      %v307 = vld [vmem:[%s1 + $0x198] sm:$0xff]
      %v308 = vld [vmem:[%s1 + $0x1a0] sm:$0xff]
      %v309 = vld [vmem:[%s1 + $0x1a8] sm:$0xff]
      %v310 = vld [vmem:[%s1 + $0x1b0] sm:$0xff]
      %v311 = vld [vmem:[%s1 + $0x1b8] sm:$0xff]
      %v312 = vld [vmem:[%s1 + $0x1c0] sm:$0xff]
      %v313 = vld [vmem:[%s1 + $0x1c8] sm:$0xff]
      %v314 = vld [vmem:[%s1 + $0x1d0] sm:$0xff]
      %v315 = vld [vmem:[%s1 + $0x1d8] sm:$0xff]
      %v316 = vld [vmem:[%s1 + $0x1e0] sm:$0xff]
      %v317 = vld [vmem:[%s1 + $0x1e8] sm:$0xff]
      %v318 = vld [vmem:[%s1 + $0x1f0] sm:$0xff]
      %v319 = vld [vmem:[%s1 + $0x1f8] sm:$0xff]
      %v320 = vld [vmem:[%s2] sm:$0x3]
      %v321 = vld [vmem:[%s3] sm:$0x3]
      %s322 = scalar_lea.vmem %s3, 2
      %v323 = vld [vmem:[%s322] sm:$0x3]
      %s324 = scalar_lea.vmem %s3, 4
      %v325 = vld [vmem:[%s324] sm:$0x3]
      %s326 = scalar_lea.vmem %s3, 6
      %v327 = vld [vmem:[%s326] sm:$0x3]
      %s328 = scalar_lea.vmem %s3, 8
      %v329 = vld [vmem:[%s328] sm:$0x3]
      %s330 = scalar_lea.vmem %s3, 10
      %v331 = vld [vmem:[%s330] sm:$0x3]
      %s332 = scalar_lea.vmem %s3, 12
      %v333 = vld [vmem:[%s332] sm:$0x3]
      %s334 = scalar_lea.vmem %s3, 14
      %v335 = vld [vmem:[%s334] sm:$0x3]
      %s336 = scalar_lea.vmem %s3, 16
      %v337 = vld [vmem:[%s336] sm:$0x3]
      %338 = vmatprep.subr.mxu0 %v257
      %339 = vmatpush1.msra.mxu0 %v256
      %340 = vmatprep.subr.mxu0 %v259
      %341 = vmatpush1.msra.mxu0 %v258
      %342 = vmatprep.subr.mxu0 %v261
      %343 = vmatpush1.msra.mxu0 %v260
      %344 = vmatprep.subr.mxu0 %v263
      %345 = vmatpush1.msra.mxu0 %v262
      %346 = vmatprep.subr.mxu0 %v265
      %347 = vmatpush1.msra.mxu0 %v264
      %348 = vmatprep.subr.mxu0 %v267
      %349 = vmatpush1.msra.mxu0 %v266
      %350 = vmatprep.subr.mxu0 %v269
      %351 = vmatpush1.msra.mxu0 %v268
      %352 = vmatprep.subr.mxu0 %v271
      %353 = vmatpush1.msra.mxu0 %v270
      %354 = vmatprep.subr.mxu0 %v273
      %355 = vmatpush1.msra.mxu0 %v272
      %356 = vmatprep.subr.mxu0 %v275
      %357 = vmatpush1.msra.mxu0 %v274
      %358 = vmatprep.subr.mxu0 %v277
      %359 = vmatpush1.msra.mxu0 %v276
      %360 = vmatprep.subr.mxu0 %v279
      %361 = vmatpush1.msra.mxu0 %v278
      %362 = vmatprep.subr.mxu0 %v281
      %363 = vmatpush1.msra.mxu0 %v280
      %364 = vmatprep.subr.mxu0 %v283
      %365 = vmatpush1.msra.mxu0 %v282
      %366 = vmatprep.subr.mxu0 %v285
      %367 = vmatpush1.msra.mxu0 %v284
      %368 = vmatprep.subr.mxu0 %v287
      %369 = vmatpush1.msra.mxu0 %v286
      %370 = vmatprep.subr.mxu0 %v289
      %371 = vmatpush1.msra.mxu0 %v288
      %372 = vmatprep.subr.mxu0 %v291
      %373 = vmatpush1.msra.mxu0 %v290
      %374 = vmatprep.subr.mxu0 %v293
      %375 = vmatpush1.msra.mxu0 %v292
      %376 = vmatprep.subr.mxu0 %v295
      %377 = vmatpush1.msra.mxu0 %v294
      %378 = vmatprep.subr.mxu0 %v297
      %379 = vmatpush1.msra.mxu0 %v296
      %380 = vmatprep.subr.mxu0 %v299
      %381 = vmatpush1.msra.mxu0 %v298
      %382 = vmatprep.subr.mxu0 %v301
      %383 = vmatpush1.msra.mxu0 %v300
      %384 = vmatprep.subr.mxu0 %v303
      %385 = vmatpush1.msra.mxu0 %v302
      %386 = vmatprep.subr.mxu0 %v305
      %387 = vmatpush1.msra.mxu0 %v304
      %388 = vmatprep.subr.mxu0 %v307
      %389 = vmatpush1.msra.mxu0 %v306
      %390 = vmatprep.subr.mxu0 %v309
      %391 = vmatpush1.msra.mxu0 %v308
      %392 = vmatprep.subr.mxu0 %v311
      %393 = vmatpush1.msra.mxu0 %v310
      %394 = vmatprep.subr.mxu0 %v313
      %395 = vmatpush1.msra.mxu0 %v312
      %396 = vmatprep.subr.mxu0 %v315
      %397 = vmatpush1.msra.mxu0 %v314
      %398 = vmatprep.subr.mxu0 %v317
      %399 = vmatpush1.msra.mxu0 %v316
      %400 = vmatprep.subr.mxu0 %v319
      %401 = vmatpush1.msra.mxu0 %v318
      %402 = vmatprep.mubr.f32.mxu0 %v253
      %403 = vmatmul.mubr.f32.gmra.mrb[0].mxu0 %v252
      %v404 = vpop.f32.mrb[0].mxu0
      %v405 = vadd.f32 0.0, %v404
      %v406 = vpop.f32.mrb[0].mxu0
      %v407 = vadd.f32 0.0, %v406
      %408 = vmatprep.mubr.f32.mxu0 %v255
      %409 = vmatmul.mubr.f32.gmra.mrb[0].mxu0 %v254
      %v410 = vpop.f32.mrb[0].mxu0
      %v411 = vadd.f32 0.0, %v410
      %v412 = vpop.f32.mrb[0].mxu0
      %v413 = vadd.f32 0.0, %v412
      %414 = vdwg.mxu0
      %v416 = vlaneseq
      %v417 = vshrl.u32 %v416, 7
      %v418 = vsub.s32 0, %v417
      %v419 = vrot.slane %v320, %v418
      %v420 = vlaneseq
      %v421 = vshrl.u32 %v420, 7
      %v422 = vsub.s32 1, %v421
      %v423 = vrot.slane %v320, %v422
      %v426 = vmul.f32 %v405, %v419
      %v427 = vmul.f32 %v407, %v423
      %v428 = vmul.f32 %v411, %v419
      %v429 = vmul.f32 %v413, %v423
      %v430 = vmul.f32 %v252, %v252
      %v431 = vmul.f32 %v253, %v253
      %v432 = vmul.f32 %v254, %v254
      %v433 = vmul.f32 %v255, %v255
      %434 = vmatprep.subr.mxu0 %v257
      %435 = vmatpush1.msra.mxu0 %v256
      %436 = vmatprep.subr.mxu0 %v259
      %437 = vmatpush1.msra.mxu0 %v258
      %438 = vmatprep.subr.mxu0 %v261
      %439 = vmatpush1.msra.mxu0 %v260
      %440 = vmatprep.subr.mxu0 %v263
      %441 = vmatpush1.msra.mxu0 %v262
      %442 = vmatprep.subr.mxu0 %v265
      %443 = vmatpush1.msra.mxu0 %v264
      %444 = vmatprep.subr.mxu0 %v267
      %445 = vmatpush1.msra.mxu0 %v266
      %446 = vmatprep.subr.mxu0 %v269
      %447 = vmatpush1.msra.mxu0 %v268
      %448 = vmatprep.subr.mxu0 %v271
      %449 = vmatpush1.msra.mxu0 %v270
      %450 = vmatprep.subr.mxu0 %v273
      %451 = vmatpush1.msra.mxu0 %v272
      %452 = vmatprep.subr.mxu0 %v275
      %453 = vmatpush1.msra.mxu0 %v274
      %454 = vmatprep.subr.mxu0 %v277
      %455 = vmatpush1.msra.mxu0 %v276
      %456 = vmatprep.subr.mxu0 %v279
      %457 = vmatpush1.msra.mxu0 %v278
      %458 = vmatprep.subr.mxu0 %v281
      %459 = vmatpush1.msra.mxu0 %v280
      %460 = vmatprep.subr.mxu0 %v283
      %461 = vmatpush1.msra.mxu0 %v282
      %462 = vmatprep.subr.mxu0 %v285
      %463 = vmatpush1.msra.mxu0 %v284
      %464 = vmatprep.subr.mxu0 %v287
      %465 = vmatpush1.msra.mxu0 %v286
      %466 = vmatprep.subr.mxu0 %v289
      %467 = vmatpush1.msra.mxu0 %v288
      %468 = vmatprep.subr.mxu0 %v291
      %469 = vmatpush1.msra.mxu0 %v290
      %470 = vmatprep.subr.mxu0 %v293
      %471 = vmatpush1.msra.mxu0 %v292
      %472 = vmatprep.subr.mxu0 %v295
      %473 = vmatpush1.msra.mxu0 %v294
      %474 = vmatprep.subr.mxu0 %v297
      %475 = vmatpush1.msra.mxu0 %v296
      %476 = vmatprep.subr.mxu0 %v299
      %477 = vmatpush1.msra.mxu0 %v298
      %478 = vmatprep.subr.mxu0 %v301
      %479 = vmatpush1.msra.mxu0 %v300
      %480 = vmatprep.subr.mxu0 %v303
      %481 = vmatpush1.msra.mxu0 %v302
      %482 = vmatprep.subr.mxu0 %v305
      %483 = vmatpush1.msra.mxu0 %v304
      %484 = vmatprep.subr.mxu0 %v307
      %485 = vmatpush1.msra.mxu0 %v306
      %486 = vmatprep.subr.mxu0 %v309
      %487 = vmatpush1.msra.mxu0 %v308
      %488 = vmatprep.subr.mxu0 %v311
      %489 = vmatpush1.msra.mxu0 %v310
      %490 = vmatprep.subr.mxu0 %v313
      %491 = vmatpush1.msra.mxu0 %v312
      %492 = vmatprep.subr.mxu0 %v315
      %493 = vmatpush1.msra.mxu0 %v314
      %494 = vmatprep.subr.mxu0 %v317
      %495 = vmatpush1.msra.mxu0 %v316
      %496 = vmatprep.subr.mxu0 %v319
      %497 = vmatpush1.msra.mxu0 %v318
      %498 = vmatprep.mubr.f32.mxu0 %v431
      %499 = vmatmul.mubr.f32.gmra.mrb[0].mxu0 %v430
      %v500 = vpop.f32.mrb[0].mxu0
      %v501 = vadd.f32 0.0, %v500
      %v502 = vpop.f32.mrb[0].mxu0
      %v503 = vadd.f32 0.0, %v502
      %504 = vmatprep.mubr.f32.mxu0 %v433
      %505 = vmatmul.mubr.f32.gmra.mrb[0].mxu0 %v432
      %v506 = vpop.f32.mrb[0].mxu0
      %v507 = vadd.f32 0.0, %v506
      %v508 = vpop.f32.mrb[0].mxu0
      %v509 = vadd.f32 0.0, %v508
      %510 = vdwg.mxu0
      %v511 = vmul.f32 %v501, %v419
      %v512 = vmul.f32 %v503, %v423
      %v513 = vmul.f32 %v507, %v419
      %v514 = vmul.f32 %v509, %v423
      %v515 = vmul.f32 %v426, %v426
      %v516 = vmul.f32 %v427, %v427
      %v517 = vmul.f32 %v428, %v428
      %v518 = vmul.f32 %v429, %v429
      %v519 = vsub.f32 %v511, %v515
      %v520 = vsub.f32 %v512, %v516
      %v521 = vsub.f32 %v513, %v517
      %v522 = vsub.f32 %v514, %v518
      %v523 = vadd.f32 %v519, 1.0
      %v524 = vadd.f32 %v520, 1.0
      %v525 = vadd.f32 %v521, 1.0
      %v526 = vadd.f32 %v522, 1.0
      %v527 = vrcp.pop %v523
      %v528 = vmul.f32 %v519, %v527
      %v529 = vrcp.pop %v524
      %v530 = vmul.f32 %v520, %v529
      %v531 = vrcp.pop %v525
      %v532 = vmul.f32 %v521, %v531
      %v533 = vrcp.pop %v526
      %v534 = vmul.f32 %v522, %v533
      %v535 = vmul.f32 %v528, %v426
      %v536 = vmul.f32 %v530, %v427
      %v537 = vmul.f32 %v532, %v428
      %v538 = vmul.f32 %v534, %v429
      %v539 = vsub.f32 %v426, %v535
      %v540 = vsub.f32 %v427, %v536
      %v541 = vsub.f32 %v428, %v537
      %v542 = vsub.f32 %v429, %v538
      %543 = vmatprep.subr.mxu0 %v257
      %544 = vmatpush1.msra.mxu0 %v256
      %545 = vmatprep.subr.mxu0 %v259
      %546 = vmatpush1.msra.mxu0 %v258
      %547 = vmatprep.subr.mxu0 %v261
      %548 = vmatpush1.msra.mxu0 %v260
      %549 = vmatprep.subr.mxu0 %v263
      %550 = vmatpush1.msra.mxu0 %v262
      %551 = vmatprep.subr.mxu0 %v265
      %552 = vmatpush1.msra.mxu0 %v264
      %553 = vmatprep.subr.mxu0 %v267
      %554 = vmatpush1.msra.mxu0 %v266
      %555 = vmatprep.subr.mxu0 %v269
      %556 = vmatpush1.msra.mxu0 %v268
      %557 = vmatprep.subr.mxu0 %v271
      %558 = vmatpush1.msra.mxu0 %v270
      %559 = vmatprep.subr.mxu0 %v273
      %560 = vmatpush1.msra.mxu0 %v272
      %561 = vmatprep.subr.mxu0 %v275
      %562 = vmatpush1.msra.mxu0 %v274
      %563 = vmatprep.subr.mxu0 %v277
      %564 = vmatpush1.msra.mxu0 %v276
      %565 = vmatprep.subr.mxu0 %v279
      %566 = vmatpush1.msra.mxu0 %v278
      %567 = vmatprep.subr.mxu0 %v281
      %568 = vmatpush1.msra.mxu0 %v280
      %569 = vmatprep.subr.mxu0 %v283
      %570 = vmatpush1.msra.mxu0 %v282
      %571 = vmatprep.subr.mxu0 %v285
      %572 = vmatpush1.msra.mxu0 %v284
      %573 = vmatprep.subr.mxu0 %v287
      %574 = vmatpush1.msra.mxu0 %v286
      %575 = vmatprep.subr.mxu0 %v289
      %576 = vmatpush1.msra.mxu0 %v288
      %577 = vmatprep.subr.mxu0 %v291
      %578 = vmatpush1.msra.mxu0 %v290
      %579 = vmatprep.subr.mxu0 %v293
      %580 = vmatpush1.msra.mxu0 %v292
      %581 = vmatprep.subr.mxu0 %v295
      %582 = vmatpush1.msra.mxu0 %v294
      %583 = vmatprep.subr.mxu0 %v297
      %584 = vmatpush1.msra.mxu0 %v296
      %585 = vmatprep.subr.mxu0 %v299
      %586 = vmatpush1.msra.mxu0 %v298
      %587 = vmatprep.subr.mxu0 %v301
      %588 = vmatpush1.msra.mxu0 %v300
      %589 = vmatprep.subr.mxu0 %v303
      %590 = vmatpush1.msra.mxu0 %v302
      %591 = vmatprep.subr.mxu0 %v305
      %592 = vmatpush1.msra.mxu0 %v304
      %593 = vmatprep.subr.mxu0 %v307
      %594 = vmatpush1.msra.mxu0 %v306
      %595 = vmatprep.subr.mxu0 %v309
      %596 = vmatpush1.msra.mxu0 %v308
      %597 = vmatprep.subr.mxu0 %v311
      %598 = vmatpush1.msra.mxu0 %v310
      %599 = vmatprep.subr.mxu0 %v313
      %600 = vmatpush1.msra.mxu0 %v312
      %601 = vmatprep.subr.mxu0 %v315
      %602 = vmatpush1.msra.mxu0 %v314
      %603 = vmatprep.subr.mxu0 %v317
      %604 = vmatpush1.msra.mxu0 %v316
      %605 = vmatprep.subr.mxu0 %v319
      %606 = vmatpush1.msra.mxu0 %v318
      %607 = vmatprep.mubr.f32.mxu0 %v530
      %608 = vmatmul.mubr.f32.gmra.mrb[0].mxu0 %v528
      %v609 = vpop.f32.mrb[0].mxu0
      %v610 = vadd.f32 0.0, %v609
      %v611 = vpop.f32.mrb[0].mxu0
      %v612 = vadd.f32 0.0, %v611
      %613 = vmatprep.mubr.f32.mxu0 %v534
      %614 = vmatmul.mubr.f32.gmra.mrb[0].mxu0 %v532
      %v615 = vpop.f32.mrb[0].mxu0
      %v616 = vadd.f32 0.0, %v615
      %v617 = vpop.f32.mrb[0].mxu0
      %v618 = vadd.f32 0.0, %v617
      %619 = vdwg.mxu0
      %v620 = vmul.f32 %v610, %v419
      %v621 = vmul.f32 %v612, %v423
      %v622 = vmul.f32 %v616, %v419
      %v623 = vmul.f32 %v618, %v423
      %v624 = vmul.f32 %v620, %v252
      %v625 = vmul.f32 %v621, %v253
      %v626 = vmul.f32 %v622, %v254
      %v627 = vmul.f32 %v623, %v255
      %628 = vmatprep.subr.mxu0 %v257
      %629 = vmatpush1.msra.mxu0 %v256
      %630 = vmatprep.subr.mxu0 %v259
      %631 = vmatpush1.msra.mxu0 %v258
      %632 = vmatprep.subr.mxu0 %v261
      %633 = vmatpush1.msra.mxu0 %v260
      %634 = vmatprep.subr.mxu0 %v263
      %635 = vmatpush1.msra.mxu0 %v262
      %636 = vmatprep.subr.mxu0 %v265
      %637 = vmatpush1.msra.mxu0 %v264
      %638 = vmatprep.subr.mxu0 %v267
      %639 = vmatpush1.msra.mxu0 %v266
      %640 = vmatprep.subr.mxu0 %v269
      %641 = vmatpush1.msra.mxu0 %v268
      %642 = vmatprep.subr.mxu0 %v271
      %643 = vmatpush1.msra.mxu0 %v270
      %644 = vmatprep.subr.mxu0 %v273
      %645 = vmatpush1.msra.mxu0 %v272
      %646 = vmatprep.subr.mxu0 %v275
      %647 = vmatpush1.msra.mxu0 %v274
      %648 = vmatprep.subr.mxu0 %v277
      %649 = vmatpush1.msra.mxu0 %v276
      %650 = vmatprep.subr.mxu0 %v279
      %651 = vmatpush1.msra.mxu0 %v278
      %652 = vmatprep.subr.mxu0 %v281
      %653 = vmatpush1.msra.mxu0 %v280
      %654 = vmatprep.subr.mxu0 %v283
      %655 = vmatpush1.msra.mxu0 %v282
      %656 = vmatprep.subr.mxu0 %v285
      %657 = vmatpush1.msra.mxu0 %v284
      %658 = vmatprep.subr.mxu0 %v287
      %659 = vmatpush1.msra.mxu0 %v286
      %660 = vmatprep.subr.mxu0 %v289
      %661 = vmatpush1.msra.mxu0 %v288
      %662 = vmatprep.subr.mxu0 %v291
      %663 = vmatpush1.msra.mxu0 %v290
      %664 = vmatprep.subr.mxu0 %v293
      %665 = vmatpush1.msra.mxu0 %v292
      %666 = vmatprep.subr.mxu0 %v295
      %667 = vmatpush1.msra.mxu0 %v294
      %668 = vmatprep.subr.mxu0 %v297
      %669 = vmatpush1.msra.mxu0 %v296
      %670 = vmatprep.subr.mxu0 %v299
      %671 = vmatpush1.msra.mxu0 %v298
      %672 = vmatprep.subr.mxu0 %v301
      %673 = vmatpush1.msra.mxu0 %v300
      %674 = vmatprep.subr.mxu0 %v303
      %675 = vmatpush1.msra.mxu0 %v302
      %676 = vmatprep.subr.mxu0 %v305
      %677 = vmatpush1.msra.mxu0 %v304
      %678 = vmatprep.subr.mxu0 %v307
      %679 = vmatpush1.msra.mxu0 %v306
      %680 = vmatprep.subr.mxu0 %v309
      %681 = vmatpush1.msra.mxu0 %v308
      %682 = vmatprep.subr.mxu0 %v311
      %683 = vmatpush1.msra.mxu0 %v310
      %684 = vmatprep.subr.mxu0 %v313
      %685 = vmatpush1.msra.mxu0 %v312
      %686 = vmatprep.subr.mxu0 %v315
      %687 = vmatpush1.msra.mxu0 %v314
      %688 = vmatprep.subr.mxu0 %v317
      %689 = vmatpush1.msra.mxu0 %v316
      %690 = vmatprep.subr.mxu0 %v319
      %691 = vmatpush1.msra.mxu0 %v318
      %692 = vmatprep.mubr.f32.mxu0 %v540
      %693 = vmatmul.mubr.f32.gmra.mrb[0].mxu0 %v539
      %v694 = vpop.f32.mrb[0].mxu0
      %v695 = vadd.f32 0.0, %v694
      %v696 = vpop.f32.mrb[0].mxu0
      %v697 = vadd.f32 0.0, %v696
      %698 = vmatprep.mubr.f32.mxu0 %v542
      %699 = vmatmul.mubr.f32.gmra.mrb[0].mxu0 %v541
      %v700 = vpop.f32.mrb[0].mxu0
      %v701 = vadd.f32 0.0, %v700
      %v702 = vpop.f32.mrb[0].mxu0
      %v703 = vadd.f32 0.0, %v702
      %704 = vdwg.mxu0
      %v705 = vmul.f32 %v695, %v419
      %v706 = vmul.f32 %v697, %v423
      %v707 = vmul.f32 %v701, %v419
      %v708 = vmul.f32 %v703, %v423
      %v709 = vadd.f32 %v624, %v705
      %v710 = vadd.f32 %v625, %v706
      %v711 = vadd.f32 %v626, %v707
      %v712 = vadd.f32 %v627, %v708
      %v713 = vsub.f32 %v252, %v709
      %v714 = vsub.f32 %v253, %v710
      %v715 = vsub.f32 %v254, %v711
      %v716 = vsub.f32 %v255, %v712
      %717 = vst [vmem:[#allocation2] sm:$0xff] %v713
      %718 = vst [vmem:[#allocation2 + $0x8] sm:$0xff] %v714
      %719 = vst [vmem:[#allocation2 + $0x10] sm:$0xff] %v715
      %720 = vst [vmem:[#allocation2 + $0x18] sm:$0xff] %v716
      %v721 = vld [vmem:[#allocation2] sm:$0xff]
      %v722 = vld [vmem:[#allocation2 + $0x8] sm:$0xff]
      %v723 = vld [vmem:[#allocation2 + $0x10] sm:$0xff]
      %v724 = vld [vmem:[#allocation2 + $0x18] sm:$0xff]
      %725 = vrot.lane.b32.xlu0 %v721, 17
      %v726 = vpop.permute.xlu0 %725
      %727 = vrot.lane.b32.xlu0 %v723, 17
      %v728 = vpop.permute.xlu0 %727
      %729 = vrot.lane.b32.xlu0 %v722, 17
      %v730 = vpop.permute.xlu0 %729
      %731 = vrot.lane.b32.xlu0 %v724, 17
      %v732 = vpop.permute.xlu0 %731
      %v733 = vlaneseq
      %v734 = vand.u32 %v733, 127
      %vm735 = vcmp.lt.s32.totalorder %v734, 17
      %v736 = vsel %vm735, %v726, %v730
      %v737 = vsel %vm735, %v728, %v732
      %v738 = vsel %vm735, %v730, %v726
      %v739 = vsel %vm735, %v732, %v728
      %v741 = vlaneseq
      %v742 = vshrl.u32 %v741, 7
      %v743 = vsub.s32 0, %v742
      %v744 = vrot.slane %v321, %v743
      %v745 = vlaneseq
      %v746 = vshrl.u32 %v745, 7
      %v747 = vsub.s32 1, %v746
      %v748 = vrot.slane %v321, %v747
      %v751 = vmul.f32 %v738, %v744
      %v752 = vmul.f32 %v736, %v748
      %v753 = vmul.f32 %v739, %v744
      %v754 = vmul.f32 %v737, %v748
      %755 = vst [vmem:[#allocation4] sm:$0xff] %v751
      %756 = vst [vmem:[#allocation4 + $0x8] sm:$0xff] %v752
      %757 = vst [vmem:[#allocation4 + $0x10] sm:$0xff] %v753
      %758 = vst [vmem:[#allocation4 + $0x18] sm:$0xff] %v754
      %759 = vrot.lane.b32.xlu0 %v721, 16
      %v760 = vpop.permute.xlu0 %759
      %761 = vrot.lane.b32.xlu0 %v723, 16
      %v762 = vpop.permute.xlu0 %761
      %763 = vrot.lane.b32.xlu0 %v722, 16
      %v764 = vpop.permute.xlu0 %763
      %765 = vrot.lane.b32.xlu0 %v724, 16
      %v766 = vpop.permute.xlu0 %765
      %vm767 = vcmp.lt.s32.totalorder %v734, 16
      %v768 = vsel %vm767, %v760, %v764
      %v769 = vsel %vm767, %v762, %v766
      %v770 = vsel %vm767, %v764, %v760
      %v771 = vsel %vm767, %v766, %v762
      %v773 = vlaneseq
      %v774 = vshrl.u32 %v773, 7
      %v775 = vsub.s32 0, %v774
      %v776 = vrot.slane %v323, %v775
      %v777 = vlaneseq
      %v778 = vshrl.u32 %v777, 7
      %v779 = vsub.s32 1, %v778
      %v780 = vrot.slane %v323, %v779
      %v783 = vmul.f32 %v770, %v776
      %v784 = vmul.f32 %v768, %v780
      %v785 = vmul.f32 %v771, %v776
      %v786 = vmul.f32 %v769, %v780
      %787 = vst [vmem:[#allocation4 + $0x20] sm:$0xff] %v783
      %788 = vst [vmem:[#allocation4 + $0x28] sm:$0xff] %v784
      %789 = vst [vmem:[#allocation4 + $0x30] sm:$0xff] %v785
      %790 = vst [vmem:[#allocation4 + $0x38] sm:$0xff] %v786
      %791 = vrot.lane.b32.xlu0 %v721, 15
      %v792 = vpop.permute.xlu0 %791
      %793 = vrot.lane.b32.xlu0 %v723, 15
      %v794 = vpop.permute.xlu0 %793
      %795 = vrot.lane.b32.xlu0 %v722, 15
      %v796 = vpop.permute.xlu0 %795
      %797 = vrot.lane.b32.xlu0 %v724, 15
      %v798 = vpop.permute.xlu0 %797
      %vm799 = vcmp.lt.s32.totalorder %v734, 15
      %v800 = vsel %vm799, %v792, %v796
      %v801 = vsel %vm799, %v794, %v798
      %v802 = vsel %vm799, %v796, %v792
      %v803 = vsel %vm799, %v798, %v794
      %v805 = vlaneseq
      %v806 = vshrl.u32 %v805, 7
      %v807 = vsub.s32 0, %v806
      %v808 = vrot.slane %v325, %v807
      %v809 = vlaneseq
      %v810 = vshrl.u32 %v809, 7
      %v811 = vsub.s32 1, %v810
      %v812 = vrot.slane %v325, %v811
      %v815 = vmul.f32 %v802, %v808
      %v816 = vmul.f32 %v800, %v812
      %v817 = vmul.f32 %v803, %v808
      %v818 = vmul.f32 %v801, %v812
      %819 = vst [vmem:[#allocation4 + $0x40] sm:$0xff] %v815
      %820 = vst [vmem:[#allocation4 + $0x48] sm:$0xff] %v816
      %821 = vst [vmem:[#allocation4 + $0x50] sm:$0xff] %v817
      %822 = vst [vmem:[#allocation4 + $0x58] sm:$0xff] %v818
      %823 = vrot.lane.b32.xlu0 %v721, 1
      %v824 = vpop.permute.xlu0 %823
      %825 = vrot.lane.b32.xlu0 %v723, 1
      %v826 = vpop.permute.xlu0 %825
      %827 = vrot.lane.b32.xlu0 %v722, 1
      %v828 = vpop.permute.xlu0 %827
      %829 = vrot.lane.b32.xlu0 %v724, 1
      %v830 = vpop.permute.xlu0 %829
      %vm831 = vcmp.lt.s32.totalorder %v734, 1
      %v832 = vsel %vm831, %v824, %v828
      %v833 = vsel %vm831, %v826, %v830
      %v834 = vsel %vm831, %v828, %v824
      %v835 = vsel %vm831, %v830, %v826
      %v837 = vlaneseq
      %v838 = vshrl.u32 %v837, 7
      %v839 = vsub.s32 0, %v838
      %v840 = vrot.slane %v327, %v839
      %v841 = vlaneseq
      %v842 = vshrl.u32 %v841, 7
      %v843 = vsub.s32 1, %v842
      %v844 = vrot.slane %v327, %v843
      %v847 = vmul.f32 %v834, %v840
      %v848 = vmul.f32 %v832, %v844
      %v849 = vmul.f32 %v835, %v840
      %v850 = vmul.f32 %v833, %v844
      %851 = vst [vmem:[#allocation4 + $0x60] sm:$0xff] %v847
      %852 = vst [vmem:[#allocation4 + $0x68] sm:$0xff] %v848
      %853 = vst [vmem:[#allocation4 + $0x70] sm:$0xff] %v849
      %854 = vst [vmem:[#allocation4 + $0x78] sm:$0xff] %v850
      %v856 = vlaneseq
      %v857 = vshrl.u32 %v856, 7
      %v858 = vsub.s32 0, %v857
      %v859 = vrot.slane %v329, %v858
      %v860 = vlaneseq
      %v861 = vshrl.u32 %v860, 7
      %v862 = vsub.s32 1, %v861
      %v863 = vrot.slane %v329, %v862
      %v866 = vmul.f32 %v721, %v859
      %v867 = vmul.f32 %v722, %v863
      %v868 = vmul.f32 %v723, %v859
      %v869 = vmul.f32 %v724, %v863
      %870 = vst [vmem:[#allocation4 + $0x80] sm:$0xff] %v866
      %871 = vst [vmem:[#allocation4 + $0x88] sm:$0xff] %v867
      %872 = vst [vmem:[#allocation4 + $0x90] sm:$0xff] %v868
      %873 = vst [vmem:[#allocation4 + $0x98] sm:$0xff] %v869
      %874 = vrot.lane.b32.xlu0 %v721, 127
      %v875 = vpop.permute.xlu0 %874
      %876 = vrot.lane.b32.xlu0 %v723, 127
      %v877 = vpop.permute.xlu0 %876
      %878 = vrot.lane.b32.xlu0 %v722, 127
      %v879 = vpop.permute.xlu0 %878
      %880 = vrot.lane.b32.xlu0 %v724, 127
      %v881 = vpop.permute.xlu0 %880
      %vm882 = vcmp.lt.s32.totalorder %v734, 127
      %v883 = vsel %vm882, %v875, %v879
      %v884 = vsel %vm882, %v877, %v881
      %v885 = vsel %vm882, %v879, %v875
      %v886 = vsel %vm882, %v881, %v877
      %v888 = vlaneseq
      %v889 = vshrl.u32 %v888, 7
      %v890 = vsub.s32 0, %v889
      %v891 = vrot.slane %v331, %v890
      %v892 = vlaneseq
      %v893 = vshrl.u32 %v892, 7
      %v894 = vsub.s32 1, %v893
      %v895 = vrot.slane %v331, %v894
      %v898 = vmul.f32 %v883, %v891
      %v899 = vmul.f32 %v885, %v895
      %v900 = vmul.f32 %v884, %v891
      %v901 = vmul.f32 %v886, %v895
      %902 = vst [vmem:[#allocation4 + $0xa0] sm:$0xff] %v898
      %903 = vst [vmem:[#allocation4 + $0xa8] sm:$0xff] %v899
      %904 = vst [vmem:[#allocation4 + $0xb0] sm:$0xff] %v900
      %905 = vst [vmem:[#allocation4 + $0xb8] sm:$0xff] %v901
      %906 = vrot.lane.b32.xlu0 %v721, 113
      %v907 = vpop.permute.xlu0 %906
      %908 = vrot.lane.b32.xlu0 %v723, 113
      %v909 = vpop.permute.xlu0 %908
      %910 = vrot.lane.b32.xlu0 %v722, 113
      %v911 = vpop.permute.xlu0 %910
      %912 = vrot.lane.b32.xlu0 %v724, 113
      %v913 = vpop.permute.xlu0 %912
      %vm914 = vcmp.lt.s32.totalorder %v734, 113
      %v915 = vsel %vm914, %v907, %v911
      %v916 = vsel %vm914, %v909, %v913
      %v917 = vsel %vm914, %v911, %v907
      %v918 = vsel %vm914, %v913, %v909
      %v920 = vlaneseq
      %v921 = vshrl.u32 %v920, 7
      %v922 = vsub.s32 0, %v921
      %v923 = vrot.slane %v333, %v922
      %v924 = vlaneseq
      %v925 = vshrl.u32 %v924, 7
      %v926 = vsub.s32 1, %v925
      %v927 = vrot.slane %v333, %v926
      %v930 = vmul.f32 %v915, %v923
      %v931 = vmul.f32 %v917, %v927
      %v932 = vmul.f32 %v916, %v923
      %v933 = vmul.f32 %v918, %v927
      %934 = vst [vmem:[#allocation4 + $0xc0] sm:$0xff] %v930
      %935 = vst [vmem:[#allocation4 + $0xc8] sm:$0xff] %v931
      %936 = vst [vmem:[#allocation4 + $0xd0] sm:$0xff] %v932
      %937 = vst [vmem:[#allocation4 + $0xd8] sm:$0xff] %v933
      %938 = vrot.lane.b32.xlu0 %v721, 112
      %v939 = vpop.permute.xlu0 %938
      %940 = vrot.lane.b32.xlu0 %v723, 112
      %v941 = vpop.permute.xlu0 %940
      %942 = vrot.lane.b32.xlu0 %v722, 112
      %v943 = vpop.permute.xlu0 %942
      %944 = vrot.lane.b32.xlu0 %v724, 112
      %v945 = vpop.permute.xlu0 %944
      %vm946 = vcmp.lt.s32.totalorder %v734, 112
      %v947 = vsel %vm946, %v939, %v943
      %v948 = vsel %vm946, %v941, %v945
      %v949 = vsel %vm946, %v943, %v939
      %v950 = vsel %vm946, %v945, %v941
      %v952 = vlaneseq
      %v953 = vshrl.u32 %v952, 7
      %v954 = vsub.s32 0, %v953
      %v955 = vrot.slane %v335, %v954
      %v956 = vlaneseq
      %v957 = vshrl.u32 %v956, 7
      %v958 = vsub.s32 1, %v957
      %v959 = vrot.slane %v335, %v958
      %v962 = vmul.f32 %v947, %v955
      %v963 = vmul.f32 %v949, %v959
      %v964 = vmul.f32 %v948, %v955
      %v965 = vmul.f32 %v950, %v959
      %966 = vst [vmem:[#allocation4 + $0xe0] sm:$0xff] %v962
      %967 = vst [vmem:[#allocation4 + $0xe8] sm:$0xff] %v963
      %968 = vst [vmem:[#allocation4 + $0xf0] sm:$0xff] %v964
      %969 = vst [vmem:[#allocation4 + $0xf8] sm:$0xff] %v965
      %970 = vrot.lane.b32.xlu0 %v721, 111
      %v971 = vpop.permute.xlu0 %970
      %972 = vrot.lane.b32.xlu0 %v723, 111
      %v973 = vpop.permute.xlu0 %972
      %974 = vrot.lane.b32.xlu0 %v722, 111
      %v975 = vpop.permute.xlu0 %974
      %976 = vrot.lane.b32.xlu0 %v724, 111
      %v977 = vpop.permute.xlu0 %976
      %vm978 = vcmp.lt.s32.totalorder %v734, 111
      %v979 = vsel %vm978, %v971, %v975
      %v980 = vsel %vm978, %v973, %v977
      %v981 = vsel %vm978, %v975, %v971
      %v982 = vsel %vm978, %v977, %v973
      %v984 = vlaneseq
      %v985 = vshrl.u32 %v984, 7
      %v986 = vsub.s32 0, %v985
      %v987 = vrot.slane %v337, %v986
      %v988 = vlaneseq
      %v989 = vshrl.u32 %v988, 7
      %v990 = vsub.s32 1, %v989
      %v991 = vrot.slane %v337, %v990
      %v994 = vmul.f32 %v979, %v987
      %v995 = vmul.f32 %v981, %v991
      %v996 = vmul.f32 %v980, %v987
      %v997 = vmul.f32 %v982, %v991
      %998 = vst [vmem:[#allocation4 + $0x100] sm:$0xff] %v994
      %999 = vst [vmem:[#allocation4 + $0x108] sm:$0xff] %v995
      %1000 = vst [vmem:[#allocation4 + $0x110] sm:$0xff] %v996
      %1001 = vst [vmem:[#allocation4 + $0x118] sm:$0xff] %v997
      %v1002 = vld [vmem:[%s4] sm:$0xff]
      %v1003 = vld [vmem:[%s4 + $0x8] sm:$0xff]
      %v1004 = vld [vmem:[%s4 + $0x10] sm:$0xff]
      %v1005 = vld [vmem:[%s4 + $0x18] sm:$0xff]
      %v1006 = vld [vmem:[#allocation4] sm:$0xff]
      %v1007 = vld [vmem:[#allocation4 + $0x8] sm:$0xff]
      %v1008 = vld [vmem:[#allocation4 + $0x10] sm:$0xff]
      %v1009 = vld [vmem:[#allocation4 + $0x18] sm:$0xff]
      %v1010 = vld [vmem:[#allocation4 + $0x20] sm:$0xff]
      %v1011 = vld [vmem:[#allocation4 + $0x28] sm:$0xff]
      %v1012 = vld [vmem:[#allocation4 + $0x30] sm:$0xff]
      %v1013 = vld [vmem:[#allocation4 + $0x38] sm:$0xff]
      %v1014 = vld [vmem:[#allocation4 + $0x40] sm:$0xff]
      %v1015 = vld [vmem:[#allocation4 + $0x48] sm:$0xff]
      %v1016 = vld [vmem:[#allocation4 + $0x50] sm:$0xff]
      %v1017 = vld [vmem:[#allocation4 + $0x58] sm:$0xff]
      %v1018 = vld [vmem:[#allocation4 + $0x60] sm:$0xff]
      %v1019 = vld [vmem:[#allocation4 + $0x68] sm:$0xff]
      %v1020 = vld [vmem:[#allocation4 + $0x70] sm:$0xff]
      %v1021 = vld [vmem:[#allocation4 + $0x78] sm:$0xff]
      %v1022 = vld [vmem:[#allocation4 + $0x80] sm:$0xff]
      %v1023 = vld [vmem:[#allocation4 + $0x88] sm:$0xff]
      %v1024 = vld [vmem:[#allocation4 + $0x90] sm:$0xff]
      %v1025 = vld [vmem:[#allocation4 + $0x98] sm:$0xff]
      %v1026 = vld [vmem:[#allocation4 + $0xa0] sm:$0xff]
      %v1027 = vld [vmem:[#allocation4 + $0xa8] sm:$0xff]
      %v1028 = vld [vmem:[#allocation4 + $0xb0] sm:$0xff]
      %v1029 = vld [vmem:[#allocation4 + $0xb8] sm:$0xff]
      %v1030 = vld [vmem:[#allocation4 + $0xc0] sm:$0xff]
      %v1031 = vld [vmem:[#allocation4 + $0xc8] sm:$0xff]
      %v1032 = vld [vmem:[#allocation4 + $0xd0] sm:$0xff]
      %v1033 = vld [vmem:[#allocation4 + $0xd8] sm:$0xff]
      %v1034 = vld [vmem:[#allocation4 + $0xe0] sm:$0xff]
      %v1035 = vld [vmem:[#allocation4 + $0xe8] sm:$0xff]
      %v1036 = vld [vmem:[#allocation4 + $0xf0] sm:$0xff]
      %v1037 = vld [vmem:[#allocation4 + $0xf8] sm:$0xff]
      %v1038 = vld [vmem:[#allocation4 + $0x100] sm:$0xff]
      %v1039 = vld [vmem:[#allocation4 + $0x108] sm:$0xff]
      %v1040 = vld [vmem:[#allocation4 + $0x110] sm:$0xff]
      %v1041 = vld [vmem:[#allocation4 + $0x118] sm:$0xff]
      %v1042 = vld [vmem:[%s5] sm:$0xff]
      %v1043 = vld [vmem:[%s5 + $0x8] sm:$0xff]
      %1045 = vset.pattern.permute.xlu0 0
      %1046 = vperm.xlu0 %1045, %v1042
      %v1047 = vpop.permute.xlu0 %1046
      %1050 = vset.pattern.permute.xlu0 0
      %1051 = vperm.xlu0 %1050, %v1043
      %v1052 = vpop.permute.xlu0 %1051
      %vm1054 = vcmask 130048
      %v1056 = vsel %vm1054, %v1003, 0
      %v1059 = vsel %vm1054, %v1005, 0
      %1061 = vmatprep.subr.mxu0 %v1007
      %1062 = vmatpush1.msra.mxu0 %v1006
      %1063 = vmatprep.subr.mxu0 %v1009
      %1064 = vmatpush1.msra.mxu0 %v1008
      %1065 = vmatprep.subr.mxu0 %v1011
      %1066 = vmatpush1.msra.mxu0 %v1010
      %1067 = vmatprep.subr.mxu0 %v1013
      %1068 = vmatpush1.msra.mxu0 %v1012
      %1069 = vmatprep.subr.mxu0 %v1015
      %1070 = vmatpush1.msra.mxu0 %v1014
      %1071 = vmatprep.subr.mxu0 %v1017
      %1072 = vmatpush1.msra.mxu0 %v1016
      %1073 = vmatprep.subr.mxu0 %v1019
      %1074 = vmatpush1.msra.mxu0 %v1018
      %1075 = vmatprep.subr.mxu0 %v1021
      %1076 = vmatpush1.msra.mxu0 %v1020
      %1077 = vmatprep.subr.mxu0 %v1023
      %1078 = vmatpush1.msra.mxu0 %v1022
      %1079 = vmatprep.subr.mxu0 %v1025
      %1080 = vmatpush1.msra.mxu0 %v1024
      %1081 = vmatprep.subr.mxu0 %v1027
      %1082 = vmatpush1.msra.mxu0 %v1026
      %1083 = vmatprep.subr.mxu0 %v1029
      %1084 = vmatpush1.msra.mxu0 %v1028
      %1085 = vmatprep.subr.mxu0 %v1031
      %1086 = vmatpush1.msra.mxu0 %v1030
      %1087 = vmatprep.subr.mxu0 %v1033
      %1088 = vmatpush1.msra.mxu0 %v1032
      %1089 = vmatprep.subr.mxu0 %v1035
      %1090 = vmatpush1.msra.mxu0 %v1034
      %1091 = vmatprep.subr.mxu0 %v1037
      %1092 = vmatpush1.msra.mxu0 %v1036
      %1093 = vmatprep.subr.mxu0 %v1039
      %1094 = vmatpush1.msra.mxu0 %v1038
      %1095 = vmatprep.subr.mxu0 %v1041
      %1096 = vmatpush1.msra.mxu0 %v1040
      %1097 = vmatprep.subr.mxu0 0.0
      %1098 = vmatpush1.msra.mxu0 0.0
      %1099 = vmatprep.subr.mxu0 0.0
      %1100 = vmatpush1.msra.mxu0 0.0
      %1101 = vmatprep.subr.mxu0 0.0
      %1102 = vmatpush1.msra.mxu0 0.0
      %1103 = vmatprep.subr.mxu0 0.0
      %1104 = vmatpush1.msra.mxu0 0.0
      %1105 = vmatprep.subr.mxu0 0.0
      %1106 = vmatpush1.msra.mxu0 0.0
      %1107 = vmatprep.subr.mxu0 0.0
      %1108 = vmatpush1.msra.mxu0 0.0
      %1109 = vmatprep.subr.mxu0 0.0
      %1110 = vmatpush1.msra.mxu0 0.0
      %1111 = vmatprep.subr.mxu0 0.0
      %1112 = vmatpush1.msra.mxu0 0.0
      %1113 = vmatprep.subr.mxu0 0.0
      %1114 = vmatpush1.msra.mxu0 0.0
      %1115 = vmatprep.subr.mxu0 0.0
      %1116 = vmatpush1.msra.mxu0 0.0
      %1117 = vmatprep.subr.mxu0 0.0
      %1118 = vmatpush1.msra.mxu0 0.0
      %1119 = vmatprep.subr.mxu0 0.0
      %1120 = vmatpush1.msra.mxu0 0.0
      %1121 = vmatprep.subr.mxu0 0.0
      %1122 = vmatpush1.msra.mxu0 0.0
      %1123 = vmatprep.subr.mxu0 0.0
      %1124 = vmatpush1.msra.mxu0 0.0
      %1125 = vmatprep.mubr.f32.mxu0 %v1056
      %1126 = vmatmul.mubr.f32.gmra.mrb[0].mxu0 %v1002
      %v1127 = vpop.f32.mrb[0].mxu0
      %v1128 = vadd.f32 %v1047, %v1127
      %v1129 = vpop.f32.mrb[0].mxu0
      %v1130 = vadd.f32 %v1047, %v1129
      %1131 = vmatprep.mubr.f32.mxu0 %v1059
      %1132 = vmatmul.mubr.f32.gmra.mrb[0].mxu0 %v1004
      %v1133 = vpop.f32.mrb[0].mxu0
      %v1134 = vadd.f32 %v1052, %v1133
      %v1135 = vpop.f32.mrb[0].mxu0
      %v1136 = vadd.f32 %v1052, %v1135
      %1137 = vdwg.mxu0
      %v1138 = vmax.f32 %v1128, 0.0
      %v1139 = vmax.f32 %v1130, 0.0
      %v1140 = vmax.f32 %v1134, 0.0
      %v1141 = vmax.f32 %v1136, 0.0
      %1142 = vst [vmem:[#allocation2] sm:$0xff] %v1138
      %1143 = vst [vmem:[#allocation2 + $0x8] sm:$0xff] %v1139
      %1144 = vst [vmem:[#allocation2 + $0x10] sm:$0xff] %v1140
      %1145 = vst [vmem:[#allocation2 + $0x18] sm:$0xff] %v1141
      %v1146 = vld [vmem:[#allocation2] sm:$0xff]
      %v1147 = vld [vmem:[#allocation2 + $0x8] sm:$0xff]
      %v1148 = vld [vmem:[#allocation2 + $0x10] sm:$0xff]
      %v1149 = vld [vmem:[#allocation2 + $0x18] sm:$0xff]
      %1150 = vst [vmem:[#allocation3] sm:$0xff] %v1146
      %1151 = vst [vmem:[#allocation3 + $0x8] sm:$0xff] %v1147
      %1152 = vst [vmem:[#allocation3 + $0x10] sm:$0xff] %v1148
      %1153 = vst [vmem:[#allocation3 + $0x18] sm:$0xff] %v1149
      loop: start=1, step=1, limit=25
      $region45: #{_lambda_.1} parent=43 // loop_pre_header
        _
      $region46: #{_lambda_.1} parent=43 // loop_header
        %s1155 = sphi 1, %s1159
        %p1156 = scmp.ge.s32.totalorder %s1155, 25
      $region47: #{_lambda_.1} parent=43 // loop_header_branch
        %1158 = sbr.rel (%p1156) target = $region51
      $region48: #{_lambda_.1} parent=43 // loop_body
        %v1160 = vld [vmem:[#allocation2] sm:$0xff]
        %v1161 = vld [vmem:[#allocation2 + $0x8] sm:$0xff]
        %v1162 = vld [vmem:[#allocation2 + $0x10] sm:$0xff]
        %v1163 = vld [vmem:[#allocation2 + $0x18] sm:$0xff]
        %1164 = vrot.lane.b32.xlu0 %v1160, 17
        %v1165 = vpop.permute.xlu0 %1164
        %1166 = vrot.lane.b32.xlu0 %v1162, 17
        %v1167 = vpop.permute.xlu0 %1166
        %1168 = vrot.lane.b32.xlu0 %v1161, 17
        %v1169 = vpop.permute.xlu0 %1168
        %1170 = vrot.lane.b32.xlu0 %v1163, 17
        %v1171 = vpop.permute.xlu0 %1170
        %v1172 = vsel %vm735, %v1165, %v1169
        %v1173 = vsel %vm735, %v1167, %v1171
        %v1174 = vsel %vm735, %v1169, %v1165
        %v1175 = vsel %vm735, %v1171, %v1167
        %v1176 = vmul.f32 %v1174, %v744
        %v1177 = vmul.f32 %v1172, %v748
        %v1178 = vmul.f32 %v1175, %v744
        %v1179 = vmul.f32 %v1173, %v748
        %1180 = vst [vmem:[#allocation4] sm:$0xff] %v1176
        %1181 = vst [vmem:[#allocation4 + $0x8] sm:$0xff] %v1177
        %1182 = vst [vmem:[#allocation4 + $0x10] sm:$0xff] %v1178
        %1183 = vst [vmem:[#allocation4 + $0x18] sm:$0xff] %v1179
        %1184 = vrot.lane.b32.xlu0 %v1160, 16
        %v1185 = vpop.permute.xlu0 %1184
        %1186 = vrot.lane.b32.xlu0 %v1162, 16
        %v1187 = vpop.permute.xlu0 %1186
        %1188 = vrot.lane.b32.xlu0 %v1161, 16
        %v1189 = vpop.permute.xlu0 %1188
        %1190 = vrot.lane.b32.xlu0 %v1163, 16
        %v1191 = vpop.permute.xlu0 %1190
        %v1192 = vsel %vm767, %v1185, %v1189
        %v1193 = vsel %vm767, %v1187, %v1191
        %v1194 = vsel %vm767, %v1189, %v1185
        %v1195 = vsel %vm767, %v1191, %v1187
        %v1196 = vmul.f32 %v1194, %v776
        %v1197 = vmul.f32 %v1192, %v780
        %v1198 = vmul.f32 %v1195, %v776
        %v1199 = vmul.f32 %v1193, %v780
        %1200 = vst [vmem:[#allocation4 + $0x20] sm:$0xff] %v1196
        %1201 = vst [vmem:[#allocation4 + $0x28] sm:$0xff] %v1197
        %1202 = vst [vmem:[#allocation4 + $0x30] sm:$0xff] %v1198
        %1203 = vst [vmem:[#allocation4 + $0x38] sm:$0xff] %v1199
        %1204 = vrot.lane.b32.xlu0 %v1160, 15
        %v1205 = vpop.permute.xlu0 %1204
        %1206 = vrot.lane.b32.xlu0 %v1162, 15
        %v1207 = vpop.permute.xlu0 %1206
        %1208 = vrot.lane.b32.xlu0 %v1161, 15
        %v1209 = vpop.permute.xlu0 %1208
        %1210 = vrot.lane.b32.xlu0 %v1163, 15
        %v1211 = vpop.permute.xlu0 %1210
        %v1212 = vsel %vm799, %v1205, %v1209
        %v1213 = vsel %vm799, %v1207, %v1211
        %v1214 = vsel %vm799, %v1209, %v1205
        %v1215 = vsel %vm799, %v1211, %v1207
        %v1216 = vmul.f32 %v1214, %v808
        %v1217 = vmul.f32 %v1212, %v812
        %v1218 = vmul.f32 %v1215, %v808
        %v1219 = vmul.f32 %v1213, %v812
        %1220 = vst [vmem:[#allocation4 + $0x40] sm:$0xff] %v1216
        %1221 = vst [vmem:[#allocation4 + $0x48] sm:$0xff] %v1217
        %1222 = vst [vmem:[#allocation4 + $0x50] sm:$0xff] %v1218
        %1223 = vst [vmem:[#allocation4 + $0x58] sm:$0xff] %v1219
        %1224 = vrot.lane.b32.xlu0 %v1160, 1
        %v1225 = vpop.permute.xlu0 %1224
        %1226 = vrot.lane.b32.xlu0 %v1162, 1
        %v1227 = vpop.permute.xlu0 %1226
        %1228 = vrot.lane.b32.xlu0 %v1161, 1
        %v1229 = vpop.permute.xlu0 %1228
        %1230 = vrot.lane.b32.xlu0 %v1163, 1
        %v1231 = vpop.permute.xlu0 %1230
        %v1232 = vsel %vm831, %v1225, %v1229
        %v1233 = vsel %vm831, %v1227, %v1231
        %v1234 = vsel %vm831, %v1229, %v1225
        %v1235 = vsel %vm831, %v1231, %v1227
        %v1236 = vmul.f32 %v1234, %v840
        %v1237 = vmul.f32 %v1232, %v844
        %v1238 = vmul.f32 %v1235, %v840
        %v1239 = vmul.f32 %v1233, %v844
        %1240 = vst [vmem:[#allocation4 + $0x60] sm:$0xff] %v1236
        %1241 = vst [vmem:[#allocation4 + $0x68] sm:$0xff] %v1237
        %1242 = vst [vmem:[#allocation4 + $0x70] sm:$0xff] %v1238
        %1243 = vst [vmem:[#allocation4 + $0x78] sm:$0xff] %v1239
        %v1244 = vmul.f32 %v1160, %v859
        %v1245 = vmul.f32 %v1161, %v863
        %v1246 = vmul.f32 %v1162, %v859
        %v1247 = vmul.f32 %v1163, %v863
        %1248 = vst [vmem:[#allocation4 + $0x80] sm:$0xff] %v1244
        %1249 = vst [vmem:[#allocation4 + $0x88] sm:$0xff] %v1245
        %1250 = vst [vmem:[#allocation4 + $0x90] sm:$0xff] %v1246
        %1251 = vst [vmem:[#allocation4 + $0x98] sm:$0xff] %v1247
        %1252 = vrot.lane.b32.xlu0 %v1160, 127
        %v1253 = vpop.permute.xlu0 %1252
        %1254 = vrot.lane.b32.xlu0 %v1162, 127
        %v1255 = vpop.permute.xlu0 %1254
        %1256 = vrot.lane.b32.xlu0 %v1161, 127
        %v1257 = vpop.permute.xlu0 %1256
        %1258 = vrot.lane.b32.xlu0 %v1163, 127
        %v1259 = vpop.permute.xlu0 %1258
        %v1260 = vsel %vm882, %v1253, %v1257
        %v1261 = vsel %vm882, %v1255, %v1259
        %v1262 = vsel %vm882, %v1257, %v1253
        %v1263 = vsel %vm882, %v1259, %v1255
        %v1264 = vmul.f32 %v1260, %v891
        %v1265 = vmul.f32 %v1262, %v895
        %v1266 = vmul.f32 %v1261, %v891
        %v1267 = vmul.f32 %v1263, %v895
        %1268 = vst [vmem:[#allocation4 + $0xa0] sm:$0xff] %v1264
        %1269 = vst [vmem:[#allocation4 + $0xa8] sm:$0xff] %v1265
        %1270 = vst [vmem:[#allocation4 + $0xb0] sm:$0xff] %v1266
        %1271 = vst [vmem:[#allocation4 + $0xb8] sm:$0xff] %v1267
        %1272 = vrot.lane.b32.xlu0 %v1160, 113
        %v1273 = vpop.permute.xlu0 %1272
        %1274 = vrot.lane.b32.xlu0 %v1162, 113
        %v1275 = vpop.permute.xlu0 %1274
        %1276 = vrot.lane.b32.xlu0 %v1161, 113
        %v1277 = vpop.permute.xlu0 %1276
        %1278 = vrot.lane.b32.xlu0 %v1163, 113
        %v1279 = vpop.permute.xlu0 %1278
        %v1280 = vsel %vm914, %v1273, %v1277
        %v1281 = vsel %vm914, %v1275, %v1279
        %v1282 = vsel %vm914, %v1277, %v1273
        %v1283 = vsel %vm914, %v1279, %v1275
        %v1284 = vmul.f32 %v1280, %v923
        %v1285 = vmul.f32 %v1282, %v927
        %v1286 = vmul.f32 %v1281, %v923
        %v1287 = vmul.f32 %v1283, %v927
        %1288 = vst [vmem:[#allocation4 + $0xc0] sm:$0xff] %v1284
        %1289 = vst [vmem:[#allocation4 + $0xc8] sm:$0xff] %v1285
        %1290 = vst [vmem:[#allocation4 + $0xd0] sm:$0xff] %v1286
        %1291 = vst [vmem:[#allocation4 + $0xd8] sm:$0xff] %v1287
        %1292 = vrot.lane.b32.xlu0 %v1160, 112
        %v1293 = vpop.permute.xlu0 %1292
        %1294 = vrot.lane.b32.xlu0 %v1162, 112
        %v1295 = vpop.permute.xlu0 %1294
        %1296 = vrot.lane.b32.xlu0 %v1161, 112
        %v1297 = vpop.permute.xlu0 %1296
        %1298 = vrot.lane.b32.xlu0 %v1163, 112
        %v1299 = vpop.permute.xlu0 %1298
        %v1300 = vsel %vm946, %v1293, %v1297
        %v1301 = vsel %vm946, %v1295, %v1299
        %v1302 = vsel %vm946, %v1297, %v1293
        %v1303 = vsel %vm946, %v1299, %v1295
        %v1304 = vmul.f32 %v1300, %v955
        %v1305 = vmul.f32 %v1302, %v959
        %v1306 = vmul.f32 %v1301, %v955
        %v1307 = vmul.f32 %v1303, %v959
        %1308 = vst [vmem:[#allocation4 + $0xe0] sm:$0xff] %v1304
        %1309 = vst [vmem:[#allocation4 + $0xe8] sm:$0xff] %v1305
        %1310 = vst [vmem:[#allocation4 + $0xf0] sm:$0xff] %v1306
        %1311 = vst [vmem:[#allocation4 + $0xf8] sm:$0xff] %v1307
        %1312 = vrot.lane.b32.xlu0 %v1160, 111
        %v1313 = vpop.permute.xlu0 %1312
        %1314 = vrot.lane.b32.xlu0 %v1162, 111
        %v1315 = vpop.permute.xlu0 %1314
        %1316 = vrot.lane.b32.xlu0 %v1161, 111
        %v1317 = vpop.permute.xlu0 %1316
        %1318 = vrot.lane.b32.xlu0 %v1163, 111
        %v1319 = vpop.permute.xlu0 %1318
        %v1320 = vsel %vm978, %v1313, %v1317
        %v1321 = vsel %vm978, %v1315, %v1319
        %v1322 = vsel %vm978, %v1317, %v1313
        %v1323 = vsel %vm978, %v1319, %v1315
        %v1324 = vmul.f32 %v1320, %v987
        %v1325 = vmul.f32 %v1322, %v991
        %v1326 = vmul.f32 %v1321, %v987
        %v1327 = vmul.f32 %v1323, %v991
        %1328 = vst [vmem:[#allocation4 + $0x100] sm:$0xff] %v1324
        %1329 = vst [vmem:[#allocation4 + $0x108] sm:$0xff] %v1325
        %1330 = vst [vmem:[#allocation4 + $0x110] sm:$0xff] %v1326
        %1331 = vst [vmem:[#allocation4 + $0x118] sm:$0xff] %v1327
        %s1332 = smul.u32 %s1155, 4
        %s1333 = smul.addr %s1332, 8
        %s1334 = scalar_lea.vmem %s4, %s1333
        %v1335 = vld [vmem:[%s1334] sm:$0xff]
        %v1336 = vld [vmem:[%s1334 + $0x8] sm:$0xff]
        %v1337 = vld [vmem:[%s1334 + $0x10] sm:$0xff]
        %v1338 = vld [vmem:[%s1334 + $0x18] sm:$0xff]
        %v1339 = vld [vmem:[#allocation4] sm:$0xff]
        %v1340 = vld [vmem:[#allocation4 + $0x8] sm:$0xff]
        %v1341 = vld [vmem:[#allocation4 + $0x10] sm:$0xff]
        %v1342 = vld [vmem:[#allocation4 + $0x18] sm:$0xff]
        %v1343 = vld [vmem:[#allocation4 + $0x20] sm:$0xff]
        %v1344 = vld [vmem:[#allocation4 + $0x28] sm:$0xff]
        %v1345 = vld [vmem:[#allocation4 + $0x30] sm:$0xff]
        %v1346 = vld [vmem:[#allocation4 + $0x38] sm:$0xff]
        %v1347 = vld [vmem:[#allocation4 + $0x40] sm:$0xff]
        %v1348 = vld [vmem:[#allocation4 + $0x48] sm:$0xff]
        %v1349 = vld [vmem:[#allocation4 + $0x50] sm:$0xff]
        %v1350 = vld [vmem:[#allocation4 + $0x58] sm:$0xff]
        %v1351 = vld [vmem:[#allocation4 + $0x60] sm:$0xff]
        %v1352 = vld [vmem:[#allocation4 + $0x68] sm:$0xff]
        %v1353 = vld [vmem:[#allocation4 + $0x70] sm:$0xff]
        %v1354 = vld [vmem:[#allocation4 + $0x78] sm:$0xff]
        %v1355 = vld [vmem:[#allocation4 + $0x80] sm:$0xff]
        %v1356 = vld [vmem:[#allocation4 + $0x88] sm:$0xff]
        %v1357 = vld [vmem:[#allocation4 + $0x90] sm:$0xff]
        %v1358 = vld [vmem:[#allocation4 + $0x98] sm:$0xff]
        %v1359 = vld [vmem:[#allocation4 + $0xa0] sm:$0xff]
        %v1360 = vld [vmem:[#allocation4 + $0xa8] sm:$0xff]
        %v1361 = vld [vmem:[#allocation4 + $0xb0] sm:$0xff]
        %v1362 = vld [vmem:[#allocation4 + $0xb8] sm:$0xff]
        %v1363 = vld [vmem:[#allocation4 + $0xc0] sm:$0xff]
        %v1364 = vld [vmem:[#allocation4 + $0xc8] sm:$0xff]
        %v1365 = vld [vmem:[#allocation4 + $0xd0] sm:$0xff]
        %v1366 = vld [vmem:[#allocation4 + $0xd8] sm:$0xff]
        %v1367 = vld [vmem:[#allocation4 + $0xe0] sm:$0xff]
        %v1368 = vld [vmem:[#allocation4 + $0xe8] sm:$0xff]
        %v1369 = vld [vmem:[#allocation4 + $0xf0] sm:$0xff]
        %v1370 = vld [vmem:[#allocation4 + $0xf8] sm:$0xff]
        %v1371 = vld [vmem:[#allocation4 + $0x100] sm:$0xff]
        %v1372 = vld [vmem:[#allocation4 + $0x108] sm:$0xff]
        %v1373 = vld [vmem:[#allocation4 + $0x110] sm:$0xff]
        %v1374 = vld [vmem:[#allocation4 + $0x118] sm:$0xff]
        %s1375 = smul.u32 %s1155, 16
        %s1376 = scalar_lea.vmem %s5, %s1375
        %v1377 = vld [vmem:[%s1376] sm:$0xff]
        %v1378 = vld [vmem:[%s1376 + $0x8] sm:$0xff]
        %1380 = vset.pattern.permute.xlu0 0
        %1381 = vperm.xlu0 %1380, %v1377
        %v1382 = vpop.permute.xlu0 %1381
        %1385 = vset.pattern.permute.xlu0 0
        %1386 = vperm.xlu0 %1385, %v1378
        %v1387 = vpop.permute.xlu0 %1386
        %v1390 = vsel %vm1054, %v1336, 0
        %v1393 = vsel %vm1054, %v1338, 0
        %1395 = vmatprep.subr.mxu0 %v1340
        %1396 = vmatpush1.msra.mxu0 %v1339
        %1397 = vmatprep.subr.mxu0 %v1342
        %1398 = vmatpush1.msra.mxu0 %v1341
        %1399 = vmatprep.subr.mxu0 %v1344
        %1400 = vmatpush1.msra.mxu0 %v1343
        %1401 = vmatprep.subr.mxu0 %v1346
        %1402 = vmatpush1.msra.mxu0 %v1345
        %1403 = vmatprep.subr.mxu0 %v1348
        %1404 = vmatpush1.msra.mxu0 %v1347
        %1405 = vmatprep.subr.mxu0 %v1350
        %1406 = vmatpush1.msra.mxu0 %v1349
        %1407 = vmatprep.subr.mxu0 %v1352
        %1408 = vmatpush1.msra.mxu0 %v1351
        %1409 = vmatprep.subr.mxu0 %v1354
        %1410 = vmatpush1.msra.mxu0 %v1353
        %1411 = vmatprep.subr.mxu0 %v1356
        %1412 = vmatpush1.msra.mxu0 %v1355
        %1413 = vmatprep.subr.mxu0 %v1358
        %1414 = vmatpush1.msra.mxu0 %v1357
        %1415 = vmatprep.subr.mxu0 %v1360
        %1416 = vmatpush1.msra.mxu0 %v1359
        %1417 = vmatprep.subr.mxu0 %v1362
        %1418 = vmatpush1.msra.mxu0 %v1361
        %1419 = vmatprep.subr.mxu0 %v1364
        %1420 = vmatpush1.msra.mxu0 %v1363
        %1421 = vmatprep.subr.mxu0 %v1366
        %1422 = vmatpush1.msra.mxu0 %v1365
        %1423 = vmatprep.subr.mxu0 %v1368
        %1424 = vmatpush1.msra.mxu0 %v1367
        %1425 = vmatprep.subr.mxu0 %v1370
        %1426 = vmatpush1.msra.mxu0 %v1369
        %1427 = vmatprep.subr.mxu0 %v1372
        %1428 = vmatpush1.msra.mxu0 %v1371
        %1429 = vmatprep.subr.mxu0 %v1374
        %1430 = vmatpush1.msra.mxu0 %v1373
        %1431 = vmatprep.subr.mxu0 0.0
        %1432 = vmatpush1.msra.mxu0 0.0
        %1433 = vmatprep.subr.mxu0 0.0
        %1434 = vmatpush1.msra.mxu0 0.0
        %1435 = vmatprep.subr.mxu0 0.0
        %1436 = vmatpush1.msra.mxu0 0.0
        %1437 = vmatprep.subr.mxu0 0.0
        %1438 = vmatpush1.msra.mxu0 0.0
        %1439 = vmatprep.subr.mxu0 0.0
        %1440 = vmatpush1.msra.mxu0 0.0
        %1441 = vmatprep.subr.mxu0 0.0
        %1442 = vmatpush1.msra.mxu0 0.0
        %1443 = vmatprep.subr.mxu0 0.0
        %1444 = vmatpush1.msra.mxu0 0.0
        %1445 = vmatprep.subr.mxu0 0.0
        %1446 = vmatpush1.msra.mxu0 0.0
        %1447 = vmatprep.subr.mxu0 0.0
        %1448 = vmatpush1.msra.mxu0 0.0
        %1449 = vmatprep.subr.mxu0 0.0
        %1450 = vmatpush1.msra.mxu0 0.0
        %1451 = vmatprep.subr.mxu0 0.0
        %1452 = vmatpush1.msra.mxu0 0.0
        %1453 = vmatprep.subr.mxu0 0.0
        %1454 = vmatpush1.msra.mxu0 0.0
        %1455 = vmatprep.subr.mxu0 0.0
        %1456 = vmatpush1.msra.mxu0 0.0
        %1457 = vmatprep.subr.mxu0 0.0
        %1458 = vmatpush1.msra.mxu0 0.0
        %1459 = vmatprep.mubr.f32.mxu0 %v1390
        %1460 = vmatmul.mubr.f32.gmra.mrb[0].mxu0 %v1335
        %v1461 = vpop.f32.mrb[0].mxu0
        %v1462 = vadd.f32 %v1382, %v1461
        %v1463 = vpop.f32.mrb[0].mxu0
        %v1464 = vadd.f32 %v1382, %v1463
        %1465 = vmatprep.mubr.f32.mxu0 %v1393
        %1466 = vmatmul.mubr.f32.gmra.mrb[0].mxu0 %v1337
        %v1467 = vpop.f32.mrb[0].mxu0
        %v1468 = vadd.f32 %v1387, %v1467
        %v1469 = vpop.f32.mrb[0].mxu0
        %v1470 = vadd.f32 %v1387, %v1469
        %1471 = vdwg.mxu0
        %v1472 = vmax.f32 %v1462, 0.0
        %v1473 = vmax.f32 %v1464, 0.0
        %v1474 = vmax.f32 %v1468, 0.0
        %v1475 = vmax.f32 %v1470, 0.0
        %1476 = vst [vmem:[#allocation2] sm:$0xff] %v1472
        %1477 = vst [vmem:[#allocation2 + $0x8] sm:$0xff] %v1473
        %1478 = vst [vmem:[#allocation2 + $0x10] sm:$0xff] %v1474
        %1479 = vst [vmem:[#allocation2 + $0x18] sm:$0xff] %v1475
      $region49: #{_lambda_.1} parent=43 // loop_footer
        %s1159 = sadd.s32 1, %s1155
      $region50: #{_lambda_.1} parent=43 // loop_footer_branch
        %1154 = sbr.rel target = $region46
      $region51: #{_lambda_.1} parent=43 // loop_exit
        _
      %v1480 = vld [vmem:[#allocation2] sm:$0xff]
      %v1481 = vld [vmem:[#allocation2 + $0x8] sm:$0xff]
      %v1482 = vld [vmem:[#allocation2 + $0x10] sm:$0xff]
      %v1483 = vld [vmem:[#allocation2 + $0x18] sm:$0xff]
      %v1484 = vld [vmem:[#allocation3] sm:$0xff]
      %v1485 = vld [vmem:[#allocation3 + $0x8] sm:$0xff]
      %v1486 = vld [vmem:[#allocation3 + $0x10] sm:$0xff]
      %v1487 = vld [vmem:[#allocation3 + $0x18] sm:$0xff]
      %v1488 = vadd.f32 %v1480, %v1484
      %v1489 = vadd.f32 %v1481, %v1485
      %v1490 = vadd.f32 %v1482, %v1486
      %v1491 = vadd.f32 %v1483, %v1487
      %1492 = vst [vmem:[#allocation2] sm:$0xff] %v1488
      %1493 = vst [vmem:[#allocation2 + $0x8] sm:$0xff] %v1489
      %1494 = vst [vmem:[#allocation2 + $0x10] sm:$0xff] %v1490
      %1495 = vst [vmem:[#allocation2 + $0x18] sm:$0xff] %v1491
      %v1496 = vld [vmem:[#allocation2] sm:$0xff]
      %v1497 = vld [vmem:[#allocation2 + $0x8] sm:$0xff]
      %v1498 = vld [vmem:[#allocation2 + $0x10] sm:$0xff]
      %v1499 = vld [vmem:[#allocation2 + $0x18] sm:$0xff]
      %1500 = vrot.lane.b32.xlu0 %v1496, 17
      %v1501 = vpop.permute.xlu0 %1500
      %1502 = vrot.lane.b32.xlu0 %v1498, 17
      %v1503 = vpop.permute.xlu0 %1502
      %1504 = vrot.lane.b32.xlu0 %v1497, 17
      %v1505 = vpop.permute.xlu0 %1504
      %1506 = vrot.lane.b32.xlu0 %v1499, 17
      %v1507 = vpop.permute.xlu0 %1506
      %v1508 = vsel %vm735, %v1501, %v1505
      %v1509 = vsel %vm735, %v1503, %v1507
      %v1510 = vsel %vm735, %v1505, %v1501
      %v1511 = vsel %vm735, %v1507, %v1503
      %v1512 = vmul.f32 %v1510, %v744
      %v1513 = vmul.f32 %v1508, %v748
      %v1514 = vmul.f32 %v1511, %v744
      %v1515 = vmul.f32 %v1509, %v748
      %1516 = vst [vmem:[#allocation4] sm:$0xff] %v1512
      %1517 = vst [vmem:[#allocation4 + $0x8] sm:$0xff] %v1513
      %1518 = vst [vmem:[#allocation4 + $0x10] sm:$0xff] %v1514
      %1519 = vst [vmem:[#allocation4 + $0x18] sm:$0xff] %v1515
      %1520 = vrot.lane.b32.xlu0 %v1496, 16
      %v1521 = vpop.permute.xlu0 %1520
      %1522 = vrot.lane.b32.xlu0 %v1498, 16
      %v1523 = vpop.permute.xlu0 %1522
      %1524 = vrot.lane.b32.xlu0 %v1497, 16
      %v1525 = vpop.permute.xlu0 %1524
      %1526 = vrot.lane.b32.xlu0 %v1499, 16
      %v1527 = vpop.permute.xlu0 %1526
      %v1528 = vsel %vm767, %v1521, %v1525
      %v1529 = vsel %vm767, %v1523, %v1527
      %v1530 = vsel %vm767, %v1525, %v1521
      %v1531 = vsel %vm767, %v1527, %v1523
      %v1532 = vmul.f32 %v1530, %v776
      %v1533 = vmul.f32 %v1528, %v780
      %v1534 = vmul.f32 %v1531, %v776
      %v1535 = vmul.f32 %v1529, %v780
      %1536 = vst [vmem:[#allocation4 + $0x20] sm:$0xff] %v1532
      %1537 = vst [vmem:[#allocation4 + $0x28] sm:$0xff] %v1533
      %1538 = vst [vmem:[#allocation4 + $0x30] sm:$0xff] %v1534
      %1539 = vst [vmem:[#allocation4 + $0x38] sm:$0xff] %v1535
      %1540 = vrot.lane.b32.xlu0 %v1496, 15
      %v1541 = vpop.permute.xlu0 %1540
      %1542 = vrot.lane.b32.xlu0 %v1498, 15
      %v1543 = vpop.permute.xlu0 %1542
      %1544 = vrot.lane.b32.xlu0 %v1497, 15
      %v1545 = vpop.permute.xlu0 %1544
      %1546 = vrot.lane.b32.xlu0 %v1499, 15
      %v1547 = vpop.permute.xlu0 %1546
      %v1548 = vsel %vm799, %v1541, %v1545
      %v1549 = vsel %vm799, %v1543, %v1547
      %v1550 = vsel %vm799, %v1545, %v1541
      %v1551 = vsel %vm799, %v1547, %v1543
      %v1552 = vmul.f32 %v1550, %v808
      %v1553 = vmul.f32 %v1548, %v812
      %v1554 = vmul.f32 %v1551, %v808
      %v1555 = vmul.f32 %v1549, %v812
      %1556 = vst [vmem:[#allocation4 + $0x40] sm:$0xff] %v1552
      %1557 = vst [vmem:[#allocation4 + $0x48] sm:$0xff] %v1553
      %1558 = vst [vmem:[#allocation4 + $0x50] sm:$0xff] %v1554
      %1559 = vst [vmem:[#allocation4 + $0x58] sm:$0xff] %v1555
      %1560 = vrot.lane.b32.xlu0 %v1496, 1
      %v1561 = vpop.permute.xlu0 %1560
      %1562 = vrot.lane.b32.xlu0 %v1498, 1
      %v1563 = vpop.permute.xlu0 %1562
      %1564 = vrot.lane.b32.xlu0 %v1497, 1
      %v1565 = vpop.permute.xlu0 %1564
      %1566 = vrot.lane.b32.xlu0 %v1499, 1
      %v1567 = vpop.permute.xlu0 %1566
      %v1568 = vsel %vm831, %v1561, %v1565
      %v1569 = vsel %vm831, %v1563, %v1567
      %v1570 = vsel %vm831, %v1565, %v1561
      %v1571 = vsel %vm831, %v1567, %v1563
      %v1572 = vmul.f32 %v1570, %v840
      %v1573 = vmul.f32 %v1568, %v844
      %v1574 = vmul.f32 %v1571, %v840
      %v1575 = vmul.f32 %v1569, %v844
      %1576 = vst [vmem:[#allocation4 + $0x60] sm:$0xff] %v1572
      %1577 = vst [vmem:[#allocation4 + $0x68] sm:$0xff] %v1573
      %1578 = vst [vmem:[#allocation4 + $0x70] sm:$0xff] %v1574
      %1579 = vst [vmem:[#allocation4 + $0x78] sm:$0xff] %v1575
      %v1580 = vmul.f32 %v1496, %v859
      %v1581 = vmul.f32 %v1497, %v863
      %v1582 = vmul.f32 %v1498, %v859
      %v1583 = vmul.f32 %v1499, %v863
      %1584 = vst [vmem:[#allocation4 + $0x80] sm:$0xff] %v1580
      %1585 = vst [vmem:[#allocation4 + $0x88] sm:$0xff] %v1581
      %1586 = vst [vmem:[#allocation4 + $0x90] sm:$0xff] %v1582
      %1587 = vst [vmem:[#allocation4 + $0x98] sm:$0xff] %v1583
      %1588 = vrot.lane.b32.xlu0 %v1496, 127
      %v1589 = vpop.permute.xlu0 %1588
      %1590 = vrot.lane.b32.xlu0 %v1498, 127
      %v1591 = vpop.permute.xlu0 %1590
      %1592 = vrot.lane.b32.xlu0 %v1497, 127
      %v1593 = vpop.permute.xlu0 %1592
      %1594 = vrot.lane.b32.xlu0 %v1499, 127
      %v1595 = vpop.permute.xlu0 %1594
      %v1596 = vsel %vm882, %v1589, %v1593
      %v1597 = vsel %vm882, %v1591, %v1595
      %v1598 = vsel %vm882, %v1593, %v1589
      %v1599 = vsel %vm882, %v1595, %v1591
      %v1600 = vmul.f32 %v1596, %v891
      %v1601 = vmul.f32 %v1598, %v895
      %v1602 = vmul.f32 %v1597, %v891
      %v1603 = vmul.f32 %v1599, %v895
      %1604 = vst [vmem:[#allocation4 + $0xa0] sm:$0xff] %v1600
      %1605 = vst [vmem:[#allocation4 + $0xa8] sm:$0xff] %v1601
      %1606 = vst [vmem:[#allocation4 + $0xb0] sm:$0xff] %v1602
      %1607 = vst [vmem:[#allocation4 + $0xb8] sm:$0xff] %v1603
      %1608 = vrot.lane.b32.xlu0 %v1496, 113
      %v1609 = vpop.permute.xlu0 %1608
      %1610 = vrot.lane.b32.xlu0 %v1498, 113
      %v1611 = vpop.permute.xlu0 %1610
      %1612 = vrot.lane.b32.xlu0 %v1497, 113
      %v1613 = vpop.permute.xlu0 %1612
      %1614 = vrot.lane.b32.xlu0 %v1499, 113
      %v1615 = vpop.permute.xlu0 %1614
      %v1616 = vsel %vm914, %v1609, %v1613
      %v1617 = vsel %vm914, %v1611, %v1615
      %v1618 = vsel %vm914, %v1613, %v1609
      %v1619 = vsel %vm914, %v1615, %v1611
      %v1620 = vmul.f32 %v1616, %v923
      %v1621 = vmul.f32 %v1618, %v927
      %v1622 = vmul.f32 %v1617, %v923
      %v1623 = vmul.f32 %v1619, %v927
      %1624 = vst [vmem:[#allocation4 + $0xc0] sm:$0xff] %v1620
      %1625 = vst [vmem:[#allocation4 + $0xc8] sm:$0xff] %v1621
      %1626 = vst [vmem:[#allocation4 + $0xd0] sm:$0xff] %v1622
      %1627 = vst [vmem:[#allocation4 + $0xd8] sm:$0xff] %v1623
      %1628 = vrot.lane.b32.xlu0 %v1496, 112
      %v1629 = vpop.permute.xlu0 %1628
      %1630 = vrot.lane.b32.xlu0 %v1498, 112
      %v1631 = vpop.permute.xlu0 %1630
      %1632 = vrot.lane.b32.xlu0 %v1497, 112
      %v1633 = vpop.permute.xlu0 %1632
      %1634 = vrot.lane.b32.xlu0 %v1499, 112
      %v1635 = vpop.permute.xlu0 %1634
      %v1636 = vsel %vm946, %v1629, %v1633
      %v1637 = vsel %vm946, %v1631, %v1635
      %v1638 = vsel %vm946, %v1633, %v1629
      %v1639 = vsel %vm946, %v1635, %v1631
      %v1640 = vmul.f32 %v1636, %v955
      %v1641 = vmul.f32 %v1638, %v959
      %v1642 = vmul.f32 %v1637, %v955
      %v1643 = vmul.f32 %v1639, %v959
      %1644 = vst [vmem:[#allocation4 + $0xe0] sm:$0xff] %v1640
      %1645 = vst [vmem:[#allocation4 + $0xe8] sm:$0xff] %v1641
      %1646 = vst [vmem:[#allocation4 + $0xf0] sm:$0xff] %v1642
      %1647 = vst [vmem:[#allocation4 + $0xf8] sm:$0xff] %v1643
      %1648 = vrot.lane.b32.xlu0 %v1496, 111
      %v1649 = vpop.permute.xlu0 %1648
      %1650 = vrot.lane.b32.xlu0 %v1498, 111
      %v1651 = vpop.permute.xlu0 %1650
      %1652 = vrot.lane.b32.xlu0 %v1497, 111
      %v1653 = vpop.permute.xlu0 %1652
      %1654 = vrot.lane.b32.xlu0 %v1499, 111
      %v1655 = vpop.permute.xlu0 %1654
      %v1656 = vsel %vm978, %v1649, %v1653
      %v1657 = vsel %vm978, %v1651, %v1655
      %v1658 = vsel %vm978, %v1653, %v1649
      %v1659 = vsel %vm978, %v1655, %v1651
      %v1660 = vmul.f32 %v1656, %v987
      %v1661 = vmul.f32 %v1658, %v991
      %v1662 = vmul.f32 %v1657, %v987
      %v1663 = vmul.f32 %v1659, %v991
      %1664 = vst [vmem:[#allocation4 + $0x100] sm:$0xff] %v1660
      %1665 = vst [vmem:[#allocation4 + $0x108] sm:$0xff] %v1661
      %1666 = vst [vmem:[#allocation4 + $0x110] sm:$0xff] %v1662
      %1667 = vst [vmem:[#allocation4 + $0x118] sm:$0xff] %v1663
      %s1668 = scalar_lea.vmem %s4, 800
      %v1669 = vld [vmem:[%s1668] sm:$0xff]
      %v1670 = vld [vmem:[%s1668 + $0x8] sm:$0xff]
      %v1671 = vld [vmem:[%s1668 + $0x10] sm:$0xff]
      %v1672 = vld [vmem:[%s1668 + $0x18] sm:$0xff]
      %v1673 = vld [vmem:[#allocation4] sm:$0xff]
      %v1674 = vld [vmem:[#allocation4 + $0x8] sm:$0xff]
      %v1675 = vld [vmem:[#allocation4 + $0x10] sm:$0xff]
      %v1676 = vld [vmem:[#allocation4 + $0x18] sm:$0xff]
      %v1677 = vld [vmem:[#allocation4 + $0x20] sm:$0xff]
      %v1678 = vld [vmem:[#allocation4 + $0x28] sm:$0xff]
      %v1679 = vld [vmem:[#allocation4 + $0x30] sm:$0xff]
      %v1680 = vld [vmem:[#allocation4 + $0x38] sm:$0xff]
      %v1681 = vld [vmem:[#allocation4 + $0x40] sm:$0xff]
      %v1682 = vld [vmem:[#allocation4 + $0x48] sm:$0xff]
      %v1683 = vld [vmem:[#allocation4 + $0x50] sm:$0xff]
      %v1684 = vld [vmem:[#allocation4 + $0x58] sm:$0xff]
      %v1685 = vld [vmem:[#allocation4 + $0x60] sm:$0xff]
      %v1686 = vld [vmem:[#allocation4 + $0x68] sm:$0xff]
      %v1687 = vld [vmem:[#allocation4 + $0x70] sm:$0xff]
      %v1688 = vld [vmem:[#allocation4 + $0x78] sm:$0xff]
      %v1689 = vld [vmem:[#allocation4 + $0x80] sm:$0xff]
      %v1690 = vld [vmem:[#allocation4 + $0x88] sm:$0xff]
      %v1691 = vld [vmem:[#allocation4 + $0x90] sm:$0xff]
      %v1692 = vld [vmem:[#allocation4 + $0x98] sm:$0xff]
      %v1693 = vld [vmem:[#allocation4 + $0xa0] sm:$0xff]
      %v1694 = vld [vmem:[#allocation4 + $0xa8] sm:$0xff]
      %v1695 = vld [vmem:[#allocation4 + $0xb0] sm:$0xff]
      %v1696 = vld [vmem:[#allocation4 + $0xb8] sm:$0xff]
      %v1697 = vld [vmem:[#allocation4 + $0xc0] sm:$0xff]
      %v1698 = vld [vmem:[#allocation4 + $0xc8] sm:$0xff]
      %v1699 = vld [vmem:[#allocation4 + $0xd0] sm:$0xff]
      %v1700 = vld [vmem:[#allocation4 + $0xd8] sm:$0xff]
      %v1701 = vld [vmem:[#allocation4 + $0xe0] sm:$0xff]
      %v1702 = vld [vmem:[#allocation4 + $0xe8] sm:$0xff]
      %v1703 = vld [vmem:[#allocation4 + $0xf0] sm:$0xff]
      %v1704 = vld [vmem:[#allocation4 + $0xf8] sm:$0xff]
      %v1705 = vld [vmem:[#allocation4 + $0x100] sm:$0xff]
      %v1706 = vld [vmem:[#allocation4 + $0x108] sm:$0xff]
      %v1707 = vld [vmem:[#allocation4 + $0x110] sm:$0xff]
      %v1708 = vld [vmem:[#allocation4 + $0x118] sm:$0xff]
      %s1709 = scalar_lea.vmem %s5, 400
      %v1710 = vld [vmem:[%s1709] sm:$0xff]
      %v1711 = vld [vmem:[%s1709 + $0x8] sm:$0xff]
      %1713 = vset.pattern.permute.xlu0 0
      %1714 = vperm.xlu0 %1713, %v1710
      %v1715 = vpop.permute.xlu0 %1714
      %1718 = vset.pattern.permute.xlu0 0
      %1719 = vperm.xlu0 %1718, %v1711
      %v1720 = vpop.permute.xlu0 %1719
      %v1722 = vsel %vm1054, %v1670, 0
      %v1725 = vsel %vm1054, %v1672, 0
      %1727 = vmatprep.subr.mxu0 %v1674
      %1728 = vmatpush1.msra.mxu0 %v1673
      %1729 = vmatprep.subr.mxu0 %v1676
      %1730 = vmatpush1.msra.mxu0 %v1675
      %1731 = vmatprep.subr.mxu0 %v1678
      %1732 = vmatpush1.msra.mxu0 %v1677
      %1733 = vmatprep.subr.mxu0 %v1680
      %1734 = vmatpush1.msra.mxu0 %v1679
      %1735 = vmatprep.subr.mxu0 %v1682
      %1736 = vmatpush1.msra.mxu0 %v1681
      %1737 = vmatprep.subr.mxu0 %v1684
      %1738 = vmatpush1.msra.mxu0 %v1683
      %1739 = vmatprep.subr.mxu0 %v1686
      %1740 = vmatpush1.msra.mxu0 %v1685
      %1741 = vmatprep.subr.mxu0 %v1688
      %1742 = vmatpush1.msra.mxu0 %v1687
      %1743 = vmatprep.subr.mxu0 %v1690
      %1744 = vmatpush1.msra.mxu0 %v1689
      %1745 = vmatprep.subr.mxu0 %v1692
      %1746 = vmatpush1.msra.mxu0 %v1691
      %1747 = vmatprep.subr.mxu0 %v1694
      %1748 = vmatpush1.msra.mxu0 %v1693
      %1749 = vmatprep.subr.mxu0 %v1696
      %1750 = vmatpush1.msra.mxu0 %v1695
      %1751 = vmatprep.subr.mxu0 %v1698
      %1752 = vmatpush1.msra.mxu0 %v1697
      %1753 = vmatprep.subr.mxu0 %v1700
      %1754 = vmatpush1.msra.mxu0 %v1699
      %1755 = vmatprep.subr.mxu0 %v1702
      %1756 = vmatpush1.msra.mxu0 %v1701
      %1757 = vmatprep.subr.mxu0 %v1704
      %1758 = vmatpush1.msra.mxu0 %v1703
      %1759 = vmatprep.subr.mxu0 %v1706
      %1760 = vmatpush1.msra.mxu0 %v1705
      %1761 = vmatprep.subr.mxu0 %v1708
      %1762 = vmatpush1.msra.mxu0 %v1707
      %1763 = vmatprep.subr.mxu0 0.0
      %1764 = vmatpush1.msra.mxu0 0.0
      %1765 = vmatprep.subr.mxu0 0.0
      %1766 = vmatpush1.msra.mxu0 0.0
      %1767 = vmatprep.subr.mxu0 0.0
      %1768 = vmatpush1.msra.mxu0 0.0
      %1769 = vmatprep.subr.mxu0 0.0
      %1770 = vmatpush1.msra.mxu0 0.0
      %1771 = vmatprep.subr.mxu0 0.0
      %1772 = vmatpush1.msra.mxu0 0.0
      %1773 = vmatprep.subr.mxu0 0.0
      %1774 = vmatpush1.msra.mxu0 0.0
      %1775 = vmatprep.subr.mxu0 0.0
      %1776 = vmatpush1.msra.mxu0 0.0
      %1777 = vmatprep.subr.mxu0 0.0
      %1778 = vmatpush1.msra.mxu0 0.0
      %1779 = vmatprep.subr.mxu0 0.0
      %1780 = vmatpush1.msra.mxu0 0.0
      %1781 = vmatprep.subr.mxu0 0.0
      %1782 = vmatpush1.msra.mxu0 0.0
      %1783 = vmatprep.subr.mxu0 0.0
      %1784 = vmatpush1.msra.mxu0 0.0
      %1785 = vmatprep.subr.mxu0 0.0
      %1786 = vmatpush1.msra.mxu0 0.0
      %1787 = vmatprep.subr.mxu0 0.0
      %1788 = vmatpush1.msra.mxu0 0.0
      %1789 = vmatprep.subr.mxu0 0.0
      %1790 = vmatpush1.msra.mxu0 0.0
      %1791 = vmatprep.mubr.f32.mxu0 %v1722
      %1792 = vmatmul.mubr.f32.gmra.mrb[0].mxu0 %v1669
      %v1793 = vpop.f32.mrb[0].mxu0
      %v1794 = vadd.f32 %v1715, %v1793
      %v1795 = vpop.f32.mrb[0].mxu0
      %v1796 = vadd.f32 %v1715, %v1795
      %1797 = vmatprep.mubr.f32.mxu0 %v1725
      %1798 = vmatmul.mubr.f32.gmra.mrb[0].mxu0 %v1671
      %v1799 = vpop.f32.mrb[0].mxu0
      %v1800 = vpop.f32.mrb[0].mxu0
      %1801 = vdwg.mxu0
      %v1802 = vadd.f32 %v252, %v1794
      %v1803 = vadd.f32 %v253, %v1796
      %v1806 = vcombine.low %v1802, %v1803
      %1808 = vst [vmem:[%s251] sm:$0x77] %v1806
      %p1809 = scmp.lt.s32.totalorder %s17, 1
      %s1810 = scalar_select %p1809, %s17, 1
      %s1811 = smul.addr %s1810, 2
      %s1812 = smul.addr %s1811, 4
      %s1813 = scalar_lea.vmem %s6, %s1812
      // Predicated region
      $region52: #{_lambda_.1} parent=43 // pred_check
        %p1814 = pneg %p166
      $region53: #{_lambda_.1} parent=43 // pred_check_branch
        %1816 = sbr.rel (%p1814) target = $region55
      $region54: #{_lambda_.1} parent=43 // pred_region
        _
      $region55: #{_lambda_.1} parent=43 // pred_fallthru
        _
    $region44: #{_lambda_.1} parent=5 // pred_fallthru
      _
    %p1817 = scmp.le.s32.totalorder 2, %s12
    // Predicated region
    $region56: #{_lambda_.1} parent=5 // pred_check
      %p1818 = pneg %p1817
    $region57: #{_lambda_.1} parent=5 // pred_check_branch
      %1820 = sbr.rel (%p1818) target = $region59
    $region58: #{_lambda_.1} parent=5 // pred_region
      %s1821 = ssub.s32 %s12, 2
      // Predicated region
      $region60: #{_lambda_.1} parent=58 // pred_check
        %p1822 = pneg %p172
      $region61: #{_lambda_.1} parent=58 // pred_check_branch
        %1824 = sbr.rel (%p1822) target = $region63
      $region62: #{_lambda_.1} parent=58 // pred_region
        %p1825 = scmp.lt.s32.totalorder %s18, 1
        %s1826 = scalar_select %p1825, %s18, 1
        %s1827 = smul.addr %s1826, 2
        %s1828 = smul.addr %s1827, 4
        %s1829 = scalar_lea.vmem %s6, %s1828
      $region63: #{_lambda_.1} parent=58 // pred_fallthru
        _
    $region59: #{_lambda_.1} parent=5 // pred_fallthru
      _
  $region6: #{_lambda_.1} parent=0 // loop_footer
    %s16 = sadd.s32 1, %s12
  $region7: #{_lambda_.1} parent=0 // loop_footer_branch
    %11 = sbr.rel target = $region3
  $region8: #{_lambda_.1} parent=0 // loop_exit
    _

</llo_original>
